<compile_context>
chip_gen: v7x
topology: tpu7x:2x2x1
jax: 0.10.0
libtpu: 0.0.40
codegen_flags: <defaults>
</compile_context>

<pallas_src>
import jax
import jax.numpy as jnp
import numpy as np
from jax.experimental import pallas as pl
from jax.experimental.pallas import tpu as pltpu

LANE = 128   # lane-tile width used for the batch axis
SUB = 8      # sublane alignment


# ------------------------------ kernel helpers ------------------------------

def _silu(x):
    return x * jax.nn.sigmoid(x)


def _blockwise_layernorm(x, gamma, beta, n_leaf, h_dim, eps=1e-5):
    """Per-leaf LayerNorm over each H-row block of the stacked (N*H, B) act."""
    segs = []
    for i in range(n_leaf):
        s = x[i * h_dim:(i + 1) * h_dim]                       # aligned static slice
        mu = jnp.mean(s, axis=0, keepdims=True)                # (1, B)
        var = jnp.mean((s - mu) ** 2, axis=0, keepdims=True)   # (1, B)
        segs.append((s - mu) * jax.lax.rsqrt(var + eps))
    # gamma/beta are (N*H, 1): one lane-broadcast per use, by construction.
    return jnp.concatenate(segs, axis=0) * gamma + beta


def _attend(logits, latents, count, l_dim):
    """Softmax over `count` leaves (sublane axis) + attention-weighted combine."""
    m = jnp.max(logits, axis=0, keepdims=True)                 # (1, B)
    e = jnp.exp(logits - m)                                    # (count, B)
    inv = pl.reciprocal(jnp.sum(e, axis=0, keepdims=True))     # exact; EUP slot
    acc = latents[0:l_dim] * e[0:1]
    for i in range(1, count):
        acc = acc + latents[i * l_dim:(i + 1) * l_dim] * e[i:i + 1]
    return acc * inv                                           # (L, B)


# --------------------------- fused forward kernel ---------------------------

def make_fused_kernel(n_drug, n_target, h_dim, l_dim, depth):
    n_total = n_drug + n_target

    def kernel(x_ref, w1_ref, wa_ref, wb_ref, g1_ref, be1_ref, g2_ref, be2_ref,
               wo_ref, bo_ref, y_ref):
        # (1) ALL leaf input projections as ONE block-diagonal MXU matmul.
        #     The b1 bias rides along via the host-appended ones-row of x.
        h = _silu(jnp.dot(w1_ref[...], x_ref[...],
                          preferred_element_type=jnp.float32))            # (N*H, B)

        # (2) residual blocks: one block-diag matmul PAIR per depth level
        #     (instead of one pair per leaf per level).  Dropout == identity
        #     in eval mode.  depth is tiny here -> static unroll; for deep
        #     models stream wa/wb per level instead (see header note).
        for k in range(depth):
            y = _blockwise_layernorm(h, g1_ref[k], be1_ref[k], n_total, h_dim)
            y = _silu(jnp.dot(wa_ref[k], y, preferred_element_type=jnp.float32))
            y = jnp.dot(wb_ref[k], y, preferred_element_type=jnp.float32)
            h = _blockwise_layernorm(h + y, g2_ref[k], be2_ref[k], n_total, h_dim)

        # (3) output projection; the 1x1-conv attention logits are folded into
        #     wo/bo on the host: rows [0, N*L) are the leaf latents
        #     (leaf-major), rows [N*L, N*L+N) are the per-leaf logits.
        out = (jnp.dot(wo_ref[...], h, preferred_element_type=jnp.float32)
               + bo_ref[...])                                              # (pad, B)
        lat = out[:n_total * l_dim]                                        # (N*L, B)
        logit = out[n_total * l_dim:n_total * l_dim + n_total]             # (N,  B)

        d_comb = _attend(logit[:n_drug], lat[:n_drug * l_dim], n_drug, l_dim)
        t_comb = _attend(logit[n_drug:], lat[n_drug * l_dim:n_total * l_dim],
                         n_target, l_dim)

        # final latent dot product -> lane-dense (1, bt) output tile.
        y_ref[...] = jnp.sum(d_comb * t_comb, axis=0, keepdims=True)

    return kernel


def build_forward(batch, n_drug, n_target, hidden_dim, latent_dim, depth,
                  d_in_pad, n_out_pad, bt=LANE):
    n_total = n_drug + n_target
    nh = n_total * hidden_dim
    b_pad = -(-batch // bt) * bt
    n_tiles = b_pad // bt

    def full(shape):
        nd = len(shape)
        return pl.BlockSpec(shape, lambda b, _nd=nd: (0,) * _nd)   # resident weights

    call = pl.pallas_call(
        make_fused_kernel(n_drug, n_target, hidden_dim, latent_dim, depth),
        out_shape=jax.ShapeDtypeStruct((1, b_pad), jnp.float32),
        grid=(n_tiles,),
        in_specs=[
            pl.BlockSpec((d_in_pad, bt), lambda b: (0, b)),   # x: batch tile on lanes
            full((nh, d_in_pad)),                             # W1 block-diag (+b1 col)
            full((depth, nh, nh)),                            # Wa block-diag per depth
            full((depth, nh, nh)),                            # Wb block-diag per depth
            full((depth, nh, 1)),                             # LayerNorm1 gamma
            full((depth, nh, 1)),                             # LayerNorm1 beta
            full((depth, nh, 1)),                             # LayerNorm2 gamma
            full((depth, nh, 1)),                             # LayerNorm2 beta
            full((n_out_pad, nh)),                            # Wo block-diag + logit rows
            full((n_out_pad, 1)),                             # bo + logit biases
        ],
        out_specs=pl.BlockSpec((1, bt), lambda b: (0, b)),
        compiler_params=pltpu.CompilerParams(
            dimension_semantics=("parallel",)),   # batch tiles -> both TCs on v7x
    )

    @jax.jit
    def forward(x_packed, pk):
        y = call(x_packed, pk["w1"], pk["wa"], pk["wb"], pk["g1"], pk["be1"],
                 pk["g2"], pk["be2"], pk["wo"], pk["bo"])
        return y[0, :batch]                                   # (B,)

    return forward, b_pad


# ----------------------- host-side parameter packing ------------------------

def pack_params(params, drug_dims, target_dims, hidden_dim, latent_dim, depth):
    """Build block-diagonal weight stacks with b1 and attention logits folded in."""
    leafs = list(params["drug_leafs"]) + list(params["target_leafs"])
    dims = list(drug_dims) + list(target_dims)
    n = len(leafs)
    n_drug = len(drug_dims)
    H, L = hidden_dim, latent_dim
    d_total = sum(dims)
    d_in = d_total + 1                           # +1 ones-row carrying the b1 bias
    d_in_pad = -(-d_in // SUB) * SUB

    w1 = np.zeros((n * H, d_in_pad), np.float32)
    off = 0
    for i, (p, d) in enumerate(zip(leafs, dims)):
        w1[i * H:(i + 1) * H, off:off + d] = np.asarray(p["w1"]).T        # (H, D_i)
        w1[i * H:(i + 1) * H, d_total] = np.asarray(p["b1"]).reshape(H)   # bias column
        off += d

    wa = np.zeros((depth, n * H, n * H), np.float32)
    wb = np.zeros((depth, n * H, n * H), np.float32)
    g1 = np.zeros((depth, n * H, 1), np.float32)
    be1 = np.zeros((depth, n * H, 1), np.float32)
    g2 = np.zeros((depth, n * H, 1), np.float32)
    be2 = np.zeros((depth, n * H, 1), np.float32)
    for i, p in enumerate(leafs):
        for k in range(depth):
            wa[k, i * H:(i + 1) * H, i * H:(i + 1) * H] = np.asarray(p["wa"][k]).T
            wb[k, i * H:(i + 1) * H, i * H:(i + 1) * H] = np.asarray(p["wb"][k]).T
            g1[k, i * H:(i + 1) * H, 0] = np.asarray(p["g1"][k])
            be1[k, i * H:(i + 1) * H, 0] = np.asarray(p["be1"][k])
            g2[k, i * H:(i + 1) * H, 0] = np.asarray(p["g2"][k])
            be2[k, i * H:(i + 1) * H, 0] = np.asarray(p["be2"][k])

    # Output projection: rows [0, N*L) latents, rows [N*L, N*L+N) folded logits.
    n_out = n * L + n
    n_out_pad = -(-n_out // SUB) * SUB
    wo = np.zeros((n_out_pad, n * H), np.float32)
    bo = np.zeros((n_out_pad, 1), np.float32)
    for i, p in enumerate(leafs):
        wo_t = np.asarray(p["wo"]).T                    # (L, H)
        bo_i = np.asarray(p["bo"]).reshape(L)
        if i < n_drug:
            aw = np.asarray(params["d_attn_w"]).reshape(L)
            ab = float(np.asarray(params["d_attn_b"]).reshape(()))
        else:
            aw = np.asarray(params["t_attn_w"]).reshape(L)
            ab = float(np.asarray(params["t_attn_b"]).reshape(()))
        wo[i * L:(i + 1) * L, i * H:(i + 1) * H] = wo_t
        bo[i * L:(i + 1) * L, 0] = bo_i
        wo[n * L + i, i * H:(i + 1) * H] = aw @ wo_t    # folded attention-logit row
        bo[n * L + i, 0] = float(aw @ bo_i + ab)        # folded attention-logit bias

    packed = {k: jnp.asarray(v) for k, v in dict(
        w1=w1, wa=wa, wb=wb, g1=g1, be1=be1, g2=g2, be2=be2, wo=wo, bo=bo).items()}
    return packed, d_in_pad, n_out_pad, d_total


def pack_inputs(drug_inputs, target_inputs, d_total, d_in_pad, b_pad):
    """Concat leaf inputs along features, append ones-row (bias), pad batch to lanes."""
    xs = list(drug_inputs) + list(target_inputs)
    b = xs[0].shape[0]
    x = jnp.concatenate(xs + [jnp.ones((b, 1), jnp.float32)], axis=1)  # (B, D_total+1)
    x = jnp.pad(x, ((0, b_pad - b), (0, d_in_pad - (d_total + 1))))
    return x.T.astype(jnp.float32)                                     # (d_in_pad, b_pad)


def init_branch_params(key, input_dim, hidden_dim, latent_dim, depth):
    ks = jax.random.split(key, 6)
    d = max(depth, 1)
    return {
        "w1": 0.05 * jax.random.normal(ks[0], (input_dim, hidden_dim), jnp.float32),
        "b1": 0.01 * jax.random.normal(ks[1], (1, hidden_dim), jnp.float32),
        "g1": jnp.ones((d, hidden_dim), jnp.float32),
        "be1": jnp.zeros((d, hidden_dim), jnp.float32),
        "wa": 0.05 * jax.random.normal(ks[2], (d, hidden_dim, hidden_dim), jnp.float32),
        "wb": 0.05 * jax.random.normal(ks[3], (d, hidden_dim, hidden_dim), jnp.float32),
        "g2": jnp.ones((d, hidden_dim), jnp.float32),
        "be2": jnp.zeros((d, hidden_dim), jnp.float32),
        "wo": 0.05 * jax.random.normal(ks[4], (hidden_dim, latent_dim), jnp.float32),
        "bo": 0.01 * jax.random.normal(ks[5], (1, latent_dim), jnp.float32),
    }


# ------------------------------ pure-JAX reference ---------------------------

def _layernorm_rows(x, gamma, beta, eps=1e-5):
    mu = jnp.mean(x, axis=-1, keepdims=True)
    var = jnp.mean((x - mu) ** 2, axis=-1, keepdims=True)
    return (x - mu) * jax.lax.rsqrt(var + eps) * gamma + beta


def _branch_ref(x, p, depth):
    h = jax.nn.silu(x @ p["w1"] + p["b1"])
    for i in range(depth):
        y = _layernorm_rows(h, p["g1"][i], p["be1"][i])
        y = jax.nn.silu(y @ p["wa"][i])
        y = y @ p["wb"][i]
        h = _layernorm_rows(h + y, p["g2"][i], p["be2"][i])
    return h @ p["wo"] + p["bo"]


def _forward_ref(drug_inputs, target_inputs, params, depth):
    dl = jnp.stack([_branch_ref(x, p, depth)
                    for x, p in zip(drug_inputs, params["drug_leafs"])], axis=0)
    tl = jnp.stack([_branch_ref(x, p, depth)
                    for x, p in zip(target_inputs, params["target_leafs"])], axis=0)
    d_log = jnp.sum(dl * params["d_attn_w"][None], axis=-1) + params["d_attn_b"][0, 0]
    t_log = jnp.sum(tl * params["t_attn_w"][None], axis=-1) + params["t_attn_b"][0, 0]
    d_attn = jax.nn.softmax(d_log, axis=0)
    t_attn = jax.nn.softmax(t_log, axis=0)
    d_comb = jnp.sum(dl * d_attn[:, :, None], axis=0)
    t_comb = jnp.sum(tl * t_attn[:, :, None], axis=0)
    return jnp.sum(d_comb * t_comb, axis=-1)


# ---------------------------------- main -------------------------------------

if __name__ == "__main__":
    B = 4
    hidden_dim = 32
    latent_dim = 16
    depth = 1
    drug_dims = [12, 20]
    target_dims = [16, 24, 8]

    key = jax.random.PRNGKey(0)
    k_in, k_params, k_attn = jax.random.split(key, 3)

    # deterministic example inputs
    k_leaf_in = jax.random.split(k_in, len(drug_dims) + len(target_dims))
    drug_inputs = [jax.random.normal(k_leaf_in[i], (B, d), jnp.float32)
                   for i, d in enumerate(drug_dims)]
    target_inputs = [jax.random.normal(k_leaf_in[len(drug_dims) + i], (B, d), jnp.float32)
                     for i, d in enumerate(target_dims)]

    # deterministic synthetic parameters
    leaf_keys = jax.random.split(k_params, len(drug_dims) + len(target_dims))
    ka1, ka2, ka3, ka4 = jax.random.split(k_attn, 4)
    params = {
        "drug_leafs": [init_branch_params(leaf_keys[i], d, hidden_dim, latent_dim, depth)
                       for i, d in enumerate(drug_dims)],
        "target_leafs": [init_branch_params(leaf_keys[len(drug_dims) + i], d,
                                            hidden_dim, latent_dim, depth)
                         for i, d in enumerate(target_dims)],
        "d_attn_w": 0.1 * jax.random.normal(ka1, (1, latent_dim), jnp.float32),
        "d_attn_b": 0.1 * jax.random.normal(ka2, (1, 1), jnp.float32),
        "t_attn_w": 0.1 * jax.random.normal(ka3, (1, latent_dim), jnp.float32),
        "t_attn_b": 0.1 * jax.random.normal(ka4, (1, 1), jnp.float32),
    }

    packed, d_in_pad, n_out_pad, d_total = pack_params(
        params, drug_dims, target_dims, hidden_dim, latent_dim, depth)

    forward, b_pad = build_forward(B, len(drug_dims), len(target_dims),
                                   hidden_dim, latent_dim, depth,
                                   d_in_pad, n_out_pad)

    x_packed = pack_inputs(drug_inputs, target_inputs, d_total, d_in_pad, b_pad)

    y_hat = jax.block_until_ready(forward(x_packed, packed))
    assert y_hat.shape == (B,)

    y_ref = _forward_ref(drug_inputs, target_inputs, params, depth)
    np.testing.assert_allclose(np.asarray(y_hat), np.asarray(y_ref),
                               rtol=1e-4, atol=1e-5)

    # TODO(synk): variational path (_reparameterize / KL loss) needs in-kernel
    # RNG (pltpu.prng_*); only the deterministic (variational=False,
    # compute_kl_loss=False) forward is implemented.
    print("KERNEL_OK")
</pallas_src>

<mosaic_0001>
module attributes {stable_mosaic.version = 11 : i64} {
  func.func @kernel(%arg0: i32, %arg1: memref<88x128xf32, #tpu.memory_space<vmem>>, %arg2: memref<160x88xf32, #tpu.memory_space<vmem>>, %arg3: memref<1x160x160xf32, #tpu.memory_space<vmem>>, %arg4: memref<1x160x160xf32, #tpu.memory_space<vmem>>, %arg5: memref<1x160x1xf32, #tpu.memory_space<vmem>>, %arg6: memref<1x160x1xf32, #tpu.memory_space<vmem>>, %arg7: memref<1x160x1xf32, #tpu.memory_space<vmem>>, %arg8: memref<1x160x1xf32, #tpu.memory_space<vmem>>, %arg9: memref<88x160xf32, #tpu.memory_space<vmem>>, %arg10: memref<88x1xf32, #tpu.memory_space<vmem>>, %arg11: memref<1x128xf32, #tpu.memory_space<vmem>>) attributes {dimension_semantics = [#tpu.dimension_semantics<parallel>], iteration_bounds = array<i64: 1>, scalar_prefetch = 0 : i64, scratch_operands = 0 : i64, tpu.core_type = #tpu.core_type<tc>, window_params = [{transform_indices = @transform_0, window_bounds = array<i64: 88, 128>}, {pipeline_mode = #tpu.pipeline_mode<synchronous>, transform_indices = @transform_1, window_bounds = array<i64: 160, 88>}, {pipeline_mode = #tpu.pipeline_mode<synchronous>, transform_indices = @transform_2, window_bounds = array<i64: 1, 160, 160>}, {pipeline_mode = #tpu.pipeline_mode<synchronous>, transform_indices = @transform_3, window_bounds = array<i64: 1, 160, 160>}, {pipeline_mode = #tpu.pipeline_mode<synchronous>, transform_indices = @transform_4, window_bounds = array<i64: 1, 160, 1>}, {pipeline_mode = #tpu.pipeline_mode<synchronous>, transform_indices = @transform_5, window_bounds = array<i64: 1, 160, 1>}, {pipeline_mode = #tpu.pipeline_mode<synchronous>, transform_indices = @transform_6, window_bounds = array<i64: 1, 160, 1>}, {pipeline_mode = #tpu.pipeline_mode<synchronous>, transform_indices = @transform_7, window_bounds = array<i64: 1, 160, 1>}, {pipeline_mode = #tpu.pipeline_mode<synchronous>, transform_indices = @transform_8, window_bounds = array<i64: 88, 160>}, {pipeline_mode = #tpu.pipeline_mode<synchronous>, transform_indices = @transform_9, window_bounds = array<i64: 88, 1>}, {transform_indices = @transform_10, window_bounds = array<i64: 1, 128>}]} {
    %c0 = arith.constant 0 : index
    %c0_0 = arith.constant 0 : index
    %0 = vector.load %arg2[%c0, %c0_0] : memref<160x88xf32, #tpu.memory_space<vmem>>, vector<160x88xf32>
    %c0_1 = arith.constant 0 : index
    %c0_2 = arith.constant 0 : index
    %1 = vector.load %arg1[%c0_1, %c0_2] : memref<88x128xf32, #tpu.memory_space<vmem>>, vector<88x128xf32>
    %cst = arith.constant dense<0.000000e+00> : vector<160x128xf32>
    %2 = tpu.matmul %0, %1, %cst {dimension_numbers = #tpu.dot_dimension_numbers<[1], [0], [0], [1], [0, 0, 1, 1], [], []>} : vector<160x88xf32>, vector<88x128xf32>, vector<160x128xf32> -> vector<160x128xf32>
    %3 = arith.negf %2 : vector<160x128xf32>
    %4 = math.exp %3 : vector<160x128xf32>
    %cst_3 = arith.constant 1.000000e+00 : f32
    %5 = vector.broadcast %cst_3 : f32 to vector<160x128xf32>
    %6 = arith.addf %5, %4 : vector<160x128xf32>
    %7 = arith.divf %5, %6 : vector<160x128xf32>
    %8 = arith.mulf %2, %7 : vector<160x128xf32>
    %c0_4 = arith.constant 0 : index
    %c0_5 = arith.constant 0 : index
    %c0_6 = arith.constant 0 : index
    %9 = vector.load %arg5[%c0_4, %c0_5, %c0_6] : memref<1x160x1xf32, #tpu.memory_space<vmem>>, vector<1x160x1xf32>
    %10 = vector.shape_cast %9 : vector<1x160x1xf32> to vector<160x1xf32>
    %c0_7 = arith.constant 0 : index
    %c0_8 = arith.constant 0 : index
    %c0_9 = arith.constant 0 : index
    %11 = vector.load %arg6[%c0_7, %c0_8, %c0_9] : memref<1x160x1xf32, #tpu.memory_space<vmem>>, vector<1x160x1xf32>
    %12 = vector.shape_cast %11 : vector<1x160x1xf32> to vector<160x1xf32>
    %13 = vector.extract_strided_slice %8 {offsets = [0, 0], sizes = [32, 128], strides = [1, 1]} : vector<160x128xf32> to vector<32x128xf32>
    %cst_10 = arith.constant dense<0.000000e+00> : vector<128xf32>
    %14 = vector.multi_reduction <add>, %13, %cst_10 [0] : vector<32x128xf32> to vector<128xf32>
    %15 = vector.shape_cast %14 : vector<128xf32> to vector<1x128xf32>
    %cst_11 = arith.constant 3.200000e+01 : f32
    %16 = vector.broadcast %cst_11 : f32 to vector<1x128xf32>
    %17 = arith.divf %15, %16 : vector<1x128xf32>
    %18 = vector.broadcast %17 : vector<1x128xf32> to vector<32x128xf32>
    %19 = arith.subf %13, %18 : vector<32x128xf32>
    %20 = arith.mulf %19, %19 : vector<32x128xf32>
    %cst_12 = arith.constant dense<0.000000e+00> : vector<128xf32>
    %21 = vector.multi_reduction <add>, %20, %cst_12 [0] : vector<32x128xf32> to vector<128xf32>
    %22 = vector.shape_cast %21 : vector<128xf32> to vector<1x128xf32>
    %cst_13 = arith.constant 3.200000e+01 : f32
    %23 = vector.broadcast %cst_13 : f32 to vector<1x128xf32>
    %24 = arith.divf %22, %23 : vector<1x128xf32>
    %25 = vector.broadcast %17 : vector<1x128xf32> to vector<32x128xf32>
    %26 = arith.subf %13, %25 : vector<32x128xf32>
    %cst_14 = arith.constant 9.99999974E-6 : f32
    %27 = vector.broadcast %cst_14 : f32 to vector<1x128xf32>
    %28 = arith.addf %24, %27 : vector<1x128xf32>
    %29 = math.rsqrt %28 : vector<1x128xf32>
    %30 = vector.broadcast %29 : vector<1x128xf32> to vector<32x128xf32>
    %31 = arith.mulf %26, %30 : vector<32x128xf32>
    %32 = vector.extract_strided_slice %8 {offsets = [32, 0], sizes = [32, 128], strides = [1, 1]} : vector<160x128xf32> to vector<32x128xf32>
    %cst_15 = arith.constant dense<0.000000e+00> : vector<128xf32>
    %33 = vector.multi_reduction <add>, %32, %cst_15 [0] : vector<32x128xf32> to vector<128xf32>
    %34 = vector.shape_cast %33 : vector<128xf32> to vector<1x128xf32>
    %cst_16 = arith.constant 3.200000e+01 : f32
    %35 = vector.broadcast %cst_16 : f32 to vector<1x128xf32>
    %36 = arith.divf %34, %35 : vector<1x128xf32>
    %37 = vector.broadcast %36 : vector<1x128xf32> to vector<32x128xf32>
    %38 = arith.subf %32, %37 : vector<32x128xf32>
    %39 = arith.mulf %38, %38 : vector<32x128xf32>
    %cst_17 = arith.constant dense<0.000000e+00> : vector<128xf32>
    %40 = vector.multi_reduction <add>, %39, %cst_17 [0] : vector<32x128xf32> to vector<128xf32>
    %41 = vector.shape_cast %40 : vector<128xf32> to vector<1x128xf32>
    %cst_18 = arith.constant 3.200000e+01 : f32
    %42 = vector.broadcast %cst_18 : f32 to vector<1x128xf32>
    %43 = arith.divf %41, %42 : vector<1x128xf32>
    %44 = vector.broadcast %36 : vector<1x128xf32> to vector<32x128xf32>
    %45 = arith.subf %32, %44 : vector<32x128xf32>
    %cst_19 = arith.constant 9.99999974E-6 : f32
    %46 = vector.broadcast %cst_19 : f32 to vector<1x128xf32>
    %47 = arith.addf %43, %46 : vector<1x128xf32>
    %48 = math.rsqrt %47 : vector<1x128xf32>
    %49 = vector.broadcast %48 : vector<1x128xf32> to vector<32x128xf32>
    %50 = arith.mulf %45, %49 : vector<32x128xf32>
    %51 = vector.extract_strided_slice %8 {offsets = [64, 0], sizes = [32, 128], strides = [1, 1]} : vector<160x128xf32> to vector<32x128xf32>
    %cst_20 = arith.constant dense<0.000000e+00> : vector<128xf32>
    %52 = vector.multi_reduction <add>, %51, %cst_20 [0] : vector<32x128xf32> to vector<128xf32>
    %53 = vector.shape_cast %52 : vector<128xf32> to vector<1x128xf32>
    %cst_21 = arith.constant 3.200000e+01 : f32
    %54 = vector.broadcast %cst_21 : f32 to vector<1x128xf32>
    %55 = arith.divf %53, %54 : vector<1x128xf32>
    %56 = vector.broadcast %55 : vector<1x128xf32> to vector<32x128xf32>
    %57 = arith.subf %51, %56 : vector<32x128xf32>
    %58 = arith.mulf %57, %57 : vector<32x128xf32>
    %cst_22 = arith.constant dense<0.000000e+00> : vector<128xf32>
    %59 = vector.multi_reduction <add>, %58, %cst_22 [0] : vector<32x128xf32> to vector<128xf32>
    %60 = vector.shape_cast %59 : vector<128xf32> to vector<1x128xf32>
    %cst_23 = arith.constant 3.200000e+01 : f32
    %61 = vector.broadcast %cst_23 : f32 to vector<1x128xf32>
    %62 = arith.divf %60, %61 : vector<1x128xf32>
    %63 = vector.broadcast %55 : vector<1x128xf32> to vector<32x128xf32>
    %64 = arith.subf %51, %63 : vector<32x128xf32>
    %cst_24 = arith.constant 9.99999974E-6 : f32
    %65 = vector.broadcast %cst_24 : f32 to vector<1x128xf32>
    %66 = arith.addf %62, %65 : vector<1x128xf32>
    %67 = math.rsqrt %66 : vector<1x128xf32>
    %68 = vector.broadcast %67 : vector<1x128xf32> to vector<32x128xf32>
    %69 = arith.mulf %64, %68 : vector<32x128xf32>
    %70 = vector.extract_strided_slice %8 {offsets = [96, 0], sizes = [32, 128], strides = [1, 1]} : vector<160x128xf32> to vector<32x128xf32>
    %cst_25 = arith.constant dense<0.000000e+00> : vector<128xf32>
    %71 = vector.multi_reduction <add>, %70, %cst_25 [0] : vector<32x128xf32> to vector<128xf32>
    %72 = vector.shape_cast %71 : vector<128xf32> to vector<1x128xf32>
    %cst_26 = arith.constant 3.200000e+01 : f32
    %73 = vector.broadcast %cst_26 : f32 to vector<1x128xf32>
    %74 = arith.divf %72, %73 : vector<1x128xf32>
    %75 = vector.broadcast %74 : vector<1x128xf32> to vector<32x128xf32>
    %76 = arith.subf %70, %75 : vector<32x128xf32>
    %77 = arith.mulf %76, %76 : vector<32x128xf32>
    %cst_27 = arith.constant dense<0.000000e+00> : vector<128xf32>
    %78 = vector.multi_reduction <add>, %77, %cst_27 [0] : vector<32x128xf32> to vector<128xf32>
    %79 = vector.shape_cast %78 : vector<128xf32> to vector<1x128xf32>
    %cst_28 = arith.constant 3.200000e+01 : f32
    %80 = vector.broadcast %cst_28 : f32 to vector<1x128xf32>
    %81 = arith.divf %79, %80 : vector<1x128xf32>
    %82 = vector.broadcast %74 : vector<1x128xf32> to vector<32x128xf32>
    %83 = arith.subf %70, %82 : vector<32x128xf32>
    %cst_29 = arith.constant 9.99999974E-6 : f32
    %84 = vector.broadcast %cst_29 : f32 to vector<1x128xf32>
    %85 = arith.addf %81, %84 : vector<1x128xf32>
    %86 = math.rsqrt %85 : vector<1x128xf32>
    %87 = vector.broadcast %86 : vector<1x128xf32> to vector<32x128xf32>
    %88 = arith.mulf %83, %87 : vector<32x128xf32>
    %89 = vector.extract_strided_slice %8 {offsets = [128, 0], sizes = [32, 128], strides = [1, 1]} : vector<160x128xf32> to vector<32x128xf32>
    %cst_30 = arith.constant dense<0.000000e+00> : vector<128xf32>
    %90 = vector.multi_reduction <add>, %89, %cst_30 [0] : vector<32x128xf32> to vector<128xf32>
    %91 = vector.shape_cast %90 : vector<128xf32> to vector<1x128xf32>
    %cst_31 = arith.constant 3.200000e+01 : f32
    %92 = vector.broadcast %cst_31 : f32 to vector<1x128xf32>
    %93 = arith.divf %91, %92 : vector<1x128xf32>
    %94 = vector.broadcast %93 : vector<1x128xf32> to vector<32x128xf32>
    %95 = arith.subf %89, %94 : vector<32x128xf32>
    %96 = arith.mulf %95, %95 : vector<32x128xf32>
    %cst_32 = arith.constant dense<0.000000e+00> : vector<128xf32>
    %97 = vector.multi_reduction <add>, %96, %cst_32 [0] : vector<32x128xf32> to vector<128xf32>
    %98 = vector.shape_cast %97 : vector<128xf32> to vector<1x128xf32>
    %cst_33 = arith.constant 3.200000e+01 : f32
    %99 = vector.broadcast %cst_33 : f32 to vector<1x128xf32>
    %100 = arith.divf %98, %99 : vector<1x128xf32>
    %101 = vector.broadcast %93 : vector<1x128xf32> to vector<32x128xf32>
    %102 = arith.subf %89, %101 : vector<32x128xf32>
    %cst_34 = arith.constant 9.99999974E-6 : f32
    %103 = vector.broadcast %cst_34 : f32 to vector<1x128xf32>
    %104 = arith.addf %100, %103 : vector<1x128xf32>
    %105 = math.rsqrt %104 : vector<1x128xf32>
    %106 = vector.broadcast %105 : vector<1x128xf32> to vector<32x128xf32>
    %107 = arith.mulf %102, %106 : vector<32x128xf32>
    %108 = tpu.concatenate %31, %50, %69, %88, %107 in 0 : vector<32x128xf32>, vector<32x128xf32>, vector<32x128xf32>, vector<32x128xf32>, vector<32x128xf32> -> vector<160x128xf32>
    %109 = vector.broadcast %10 : vector<160x1xf32> to vector<160x128xf32>
    %110 = arith.mulf %108, %109 : vector<160x128xf32>
    %111 = vector.broadcast %12 : vector<160x1xf32> to vector<160x128xf32>
    %112 = arith.addf %110, %111 : vector<160x128xf32>
    %c0_35 = arith.constant 0 : index
    %c0_36 = arith.constant 0 : index
    %c0_37 = arith.constant 0 : index
    %113 = vector.load %arg3[%c0_35, %c0_36, %c0_37] : memref<1x160x160xf32, #tpu.memory_space<vmem>>, vector<1x160x160xf32>
    %114 = vector.shape_cast %113 : vector<1x160x160xf32> to vector<160x160xf32>
    %cst_38 = arith.constant dense<0.000000e+00> : vector<160x128xf32>
    %115 = tpu.matmul %114, %112, %cst_38 {dimension_numbers = #tpu.dot_dimension_numbers<[1], [0], [0], [1], [0, 0, 1, 1], [], []>} : vector<160x160xf32>, vector<160x128xf32>, vector<160x128xf32> -> vector<160x128xf32>
    %116 = arith.negf %115 : vector<160x128xf32>
    %117 = math.exp %116 : vector<160x128xf32>
    %cst_39 = arith.constant 1.000000e+00 : f32
    %118 = vector.broadcast %cst_39 : f32 to vector<160x128xf32>
    %119 = arith.addf %118, %117 : vector<160x128xf32>
    %120 = arith.divf %118, %119 : vector<160x128xf32>
    %121 = arith.mulf %115, %120 : vector<160x128xf32>
    %c0_40 = arith.constant 0 : index
    %c0_41 = arith.constant 0 : index
    %c0_42 = arith.constant 0 : index
    %122 = vector.load %arg4[%c0_40, %c0_41, %c0_42] : memref<1x160x160xf32, #tpu.memory_space<vmem>>, vector<1x160x160xf32>
    %123 = vector.shape_cast %122 : vector<1x160x160xf32> to vector<160x160xf32>
    %cst_43 = arith.constant dense<0.000000e+00> : vector<160x128xf32>
    %124 = tpu.matmul %123, %121, %cst_43 {dimension_numbers = #tpu.dot_dimension_numbers<[1], [0], [0], [1], [0, 0, 1, 1], [], []>} : vector<160x160xf32>, vector<160x128xf32>, vector<160x128xf32> -> vector<160x128xf32>
    %125 = arith.addf %8, %124 : vector<160x128xf32>
    %c0_44 = arith.constant 0 : index
    %c0_45 = arith.constant 0 : index
    %c0_46 = arith.constant 0 : index
    %126 = vector.load %arg7[%c0_44, %c0_45, %c0_46] : memref<1x160x1xf32, #tpu.memory_space<vmem>>, vector<1x160x1xf32>
    %127 = vector.shape_cast %126 : vector<1x160x1xf32> to vector<160x1xf32>
    %c0_47 = arith.constant 0 : index
    %c0_48 = arith.constant 0 : index
    %c0_49 = arith.constant 0 : index
    %128 = vector.load %arg8[%c0_47, %c0_48, %c0_49] : memref<1x160x1xf32, #tpu.memory_space<vmem>>, vector<1x160x1xf32>
    %129 = vector.shape_cast %128 : vector<1x160x1xf32> to vector<160x1xf32>
    %130 = vector.extract_strided_slice %125 {offsets = [0, 0], sizes = [32, 128], strides = [1, 1]} : vector<160x128xf32> to vector<32x128xf32>
    %cst_50 = arith.constant dense<0.000000e+00> : vector<128xf32>
    %131 = vector.multi_reduction <add>, %130, %cst_50 [0] : vector<32x128xf32> to vector<128xf32>
    %132 = vector.shape_cast %131 : vector<128xf32> to vector<1x128xf32>
    %cst_51 = arith.constant 3.200000e+01 : f32
    %133 = vector.broadcast %cst_51 : f32 to vector<1x128xf32>
    %134 = arith.divf %132, %133 : vector<1x128xf32>
    %135 = vector.broadcast %134 : vector<1x128xf32> to vector<32x128xf32>
    %136 = arith.subf %130, %135 : vector<32x128xf32>
    %137 = arith.mulf %136, %136 : vector<32x128xf32>
    %cst_52 = arith.constant dense<0.000000e+00> : vector<128xf32>
    %138 = vector.multi_reduction <add>, %137, %cst_52 [0] : vector<32x128xf32> to vector<128xf32>
    %139 = vector.shape_cast %138 : vector<128xf32> to vector<1x128xf32>
    %cst_53 = arith.constant 3.200000e+01 : f32
    %140 = vector.broadcast %cst_53 : f32 to vector<1x128xf32>
    %141 = arith.divf %139, %140 : vector<1x128xf32>
    %142 = vector.broadcast %134 : vector<1x128xf32> to vector<32x128xf32>
    %143 = arith.subf %130, %142 : vector<32x128xf32>
    %cst_54 = arith.constant 9.99999974E-6 : f32
    %144 = vector.broadcast %cst_54 : f32 to vector<1x128xf32>
    %145 = arith.addf %141, %144 : vector<1x128xf32>
    %146 = math.rsqrt %145 : vector<1x128xf32>
    %147 = vector.broadcast %146 : vector<1x128xf32> to vector<32x128xf32>
    %148 = arith.mulf %143, %147 : vector<32x128xf32>
    %149 = vector.extract_strided_slice %125 {offsets = [32, 0], sizes = [32, 128], strides = [1, 1]} : vector<160x128xf32> to vector<32x128xf32>
    %cst_55 = arith.constant dense<0.000000e+00> : vector<128xf32>
    %150 = vector.multi_reduction <add>, %149, %cst_55 [0] : vector<32x128xf32> to vector<128xf32>
    %151 = vector.shape_cast %150 : vector<128xf32> to vector<1x128xf32>
    %cst_56 = arith.constant 3.200000e+01 : f32
    %152 = vector.broadcast %cst_56 : f32 to vector<1x128xf32>
    %153 = arith.divf %151, %152 : vector<1x128xf32>
    %154 = vector.broadcast %153 : vector<1x128xf32> to vector<32x128xf32>
    %155 = arith.subf %149, %154 : vector<32x128xf32>
    %156 = arith.mulf %155, %155 : vector<32x128xf32>
    %cst_57 = arith.constant dense<0.000000e+00> : vector<128xf32>
    %157 = vector.multi_reduction <add>, %156, %cst_57 [0] : vector<32x128xf32> to vector<128xf32>
    %158 = vector.shape_cast %157 : vector<128xf32> to vector<1x128xf32>
    %cst_58 = arith.constant 3.200000e+01 : f32
    %159 = vector.broadcast %cst_58 : f32 to vector<1x128xf32>
    %160 = arith.divf %158, %159 : vector<1x128xf32>
    %161 = vector.broadcast %153 : vector<1x128xf32> to vector<32x128xf32>
    %162 = arith.subf %149, %161 : vector<32x128xf32>
    %cst_59 = arith.constant 9.99999974E-6 : f32
    %163 = vector.broadcast %cst_59 : f32 to vector<1x128xf32>
    %164 = arith.addf %160, %163 : vector<1x128xf32>
    %165 = math.rsqrt %164 : vector<1x128xf32>
    %166 = vector.broadcast %165 : vector<1x128xf32> to vector<32x128xf32>
    %167 = arith.mulf %162, %166 : vector<32x128xf32>
    %168 = vector.extract_strided_slice %125 {offsets = [64, 0], sizes = [32, 128], strides = [1, 1]} : vector<160x128xf32> to vector<32x128xf32>
    %cst_60 = arith.constant dense<0.000000e+00> : vector<128xf32>
    %169 = vector.multi_reduction <add>, %168, %cst_60 [0] : vector<32x128xf32> to vector<128xf32>
    %170 = vector.shape_cast %169 : vector<128xf32> to vector<1x128xf32>
    %cst_61 = arith.constant 3.200000e+01 : f32
    %171 = vector.broadcast %cst_61 : f32 to vector<1x128xf32>
    %172 = arith.divf %170, %171 : vector<1x128xf32>
    %173 = vector.broadcast %172 : vector<1x128xf32> to vector<32x128xf32>
    %174 = arith.subf %168, %173 : vector<32x128xf32>
    %175 = arith.mulf %174, %174 : vector<32x128xf32>
    %cst_62 = arith.constant dense<0.000000e+00> : vector<128xf32>
    %176 = vector.multi_reduction <add>, %175, %cst_62 [0] : vector<32x128xf32> to vector<128xf32>
    %177 = vector.shape_cast %176 : vector<128xf32> to vector<1x128xf32>
    %cst_63 = arith.constant 3.200000e+01 : f32
    %178 = vector.broadcast %cst_63 : f32 to vector<1x128xf32>
    %179 = arith.divf %177, %178 : vector<1x128xf32>
    %180 = vector.broadcast %172 : vector<1x128xf32> to vector<32x128xf32>
    %181 = arith.subf %168, %180 : vector<32x128xf32>
    %cst_64 = arith.constant 9.99999974E-6 : f32
    %182 = vector.broadcast %cst_64 : f32 to vector<1x128xf32>
    %183 = arith.addf %179, %182 : vector<1x128xf32>
    %184 = math.rsqrt %183 : vector<1x128xf32>
    %185 = vector.broadcast %184 : vector<1x128xf32> to vector<32x128xf32>
    %186 = arith.mulf %181, %185 : vector<32x128xf32>
    %187 = vector.extract_strided_slice %125 {offsets = [96, 0], sizes = [32, 128], strides = [1, 1]} : vector<160x128xf32> to vector<32x128xf32>
    %cst_65 = arith.constant dense<0.000000e+00> : vector<128xf32>
    %188 = vector.multi_reduction <add>, %187, %cst_65 [0] : vector<32x128xf32> to vector<128xf32>
    %189 = vector.shape_cast %188 : vector<128xf32> to vector<1x128xf32>
    %cst_66 = arith.constant 3.200000e+01 : f32
    %190 = vector.broadcast %cst_66 : f32 to vector<1x128xf32>
    %191 = arith.divf %189, %190 : vector<1x128xf32>
    %192 = vector.broadcast %191 : vector<1x128xf32> to vector<32x128xf32>
    %193 = arith.subf %187, %192 : vector<32x128xf32>
    %194 = arith.mulf %193, %193 : vector<32x128xf32>
    %cst_67 = arith.constant dense<0.000000e+00> : vector<128xf32>
    %195 = vector.multi_reduction <add>, %194, %cst_67 [0] : vector<32x128xf32> to vector<128xf32>
    %196 = vector.shape_cast %195 : vector<128xf32> to vector<1x128xf32>
    %cst_68 = arith.constant 3.200000e+01 : f32
    %197 = vector.broadcast %cst_68 : f32 to vector<1x128xf32>
    %198 = arith.divf %196, %197 : vector<1x128xf32>
    %199 = vector.broadcast %191 : vector<1x128xf32> to vector<32x128xf32>
    %200 = arith.subf %187, %199 : vector<32x128xf32>
    %cst_69 = arith.constant 9.99999974E-6 : f32
    %201 = vector.broadcast %cst_69 : f32 to vector<1x128xf32>
    %202 = arith.addf %198, %201 : vector<1x128xf32>
    %203 = math.rsqrt %202 : vector<1x128xf32>
    %204 = vector.broadcast %203 : vector<1x128xf32> to vector<32x128xf32>
    %205 = arith.mulf %200, %204 : vector<32x128xf32>
    %206 = vector.extract_strided_slice %125 {offsets = [128, 0], sizes = [32, 128], strides = [1, 1]} : vector<160x128xf32> to vector<32x128xf32>
    %cst_70 = arith.constant dense<0.000000e+00> : vector<128xf32>
    %207 = vector.multi_reduction <add>, %206, %cst_70 [0] : vector<32x128xf32> to vector<128xf32>
    %208 = vector.shape_cast %207 : vector<128xf32> to vector<1x128xf32>
    %cst_71 = arith.constant 3.200000e+01 : f32
    %209 = vector.broadcast %cst_71 : f32 to vector<1x128xf32>
    %210 = arith.divf %208, %209 : vector<1x128xf32>
    %211 = vector.broadcast %210 : vector<1x128xf32> to vector<32x128xf32>
    %212 = arith.subf %206, %211 : vector<32x128xf32>
    %213 = arith.mulf %212, %212 : vector<32x128xf32>
    %cst_72 = arith.constant dense<0.000000e+00> : vector<128xf32>
    %214 = vector.multi_reduction <add>, %213, %cst_72 [0] : vector<32x128xf32> to vector<128xf32>
    %215 = vector.shape_cast %214 : vector<128xf32> to vector<1x128xf32>
    %cst_73 = arith.constant 3.200000e+01 : f32
    %216 = vector.broadcast %cst_73 : f32 to vector<1x128xf32>
    %217 = arith.divf %215, %216 : vector<1x128xf32>
    %218 = vector.broadcast %210 : vector<1x128xf32> to vector<32x128xf32>
    %219 = arith.subf %206, %218 : vector<32x128xf32>
    %cst_74 = arith.constant 9.99999974E-6 : f32
    %220 = vector.broadcast %cst_74 : f32 to vector<1x128xf32>
    %221 = arith.addf %217, %220 : vector<1x128xf32>
    %222 = math.rsqrt %221 : vector<1x128xf32>
    %223 = vector.broadcast %222 : vector<1x128xf32> to vector<32x128xf32>
    %224 = arith.mulf %219, %223 : vector<32x128xf32>
    %225 = tpu.concatenate %148, %167, %186, %205, %224 in 0 : vector<32x128xf32>, vector<32x128xf32>, vector<32x128xf32>, vector<32x128xf32>, vector<32x128xf32> -> vector<160x128xf32>
    %226 = vector.broadcast %127 : vector<160x1xf32> to vector<160x128xf32>
    %227 = arith.mulf %225, %226 : vector<160x128xf32>
    %228 = vector.broadcast %129 : vector<160x1xf32> to vector<160x128xf32>
    %229 = arith.addf %227, %228 : vector<160x128xf32>
    %c0_75 = arith.constant 0 : index
    %c0_76 = arith.constant 0 : index
    %230 = vector.load %arg9[%c0_75, %c0_76] : memref<88x160xf32, #tpu.memory_space<vmem>>, vector<88x160xf32>
    %cst_77 = arith.constant dense<0.000000e+00> : vector<88x128xf32>
    %231 = tpu.matmul %230, %229, %cst_77 {dimension_numbers = #tpu.dot_dimension_numbers<[1], [0], [0], [1], [0, 0, 1, 1], [], []>} : vector<88x160xf32>, vector<160x128xf32>, vector<88x128xf32> -> vector<88x128xf32>
    %c0_78 = arith.constant 0 : index
    %c0_79 = arith.constant 0 : index
    %232 = vector.load %arg10[%c0_78, %c0_79] : memref<88x1xf32, #tpu.memory_space<vmem>>, vector<88x1xf32>
    %233 = vector.broadcast %232 : vector<88x1xf32> to vector<88x128xf32>
    %234 = arith.addf %231, %233 : vector<88x128xf32>
    %235 = vector.extract_strided_slice %234 {offsets = [0, 0], sizes = [80, 128], strides = [1, 1]} : vector<88x128xf32> to vector<80x128xf32>
    %236 = vector.extract_strided_slice %234 {offsets = [80, 0], sizes = [5, 128], strides = [1, 1]} : vector<88x128xf32> to vector<5x128xf32>
    %237 = vector.extract_strided_slice %236 {offsets = [0, 0], sizes = [2, 128], strides = [1, 1]} : vector<5x128xf32> to vector<2x128xf32>
    %238 = vector.extract_strided_slice %235 {offsets = [0, 0], sizes = [32, 128], strides = [1, 1]} : vector<80x128xf32> to vector<32x128xf32>
    %cst_80 = arith.constant dense<0xFF800000> : vector<128xf32>
    %239 = vector.multi_reduction <maximumf>, %237, %cst_80 [0] : vector<2x128xf32> to vector<128xf32>
    %240 = vector.shape_cast %239 : vector<128xf32> to vector<1x128xf32>
    %241 = vector.broadcast %240 : vector<1x128xf32> to vector<2x128xf32>
    %242 = arith.subf %237, %241 : vector<2x128xf32>
    %243 = math.exp %242 : vector<2x128xf32>
    %cst_81 = arith.constant dense<0.000000e+00> : vector<128xf32>
    %244 = vector.multi_reduction <add>, %243, %cst_81 [0] : vector<2x128xf32> to vector<128xf32>
    %245 = vector.shape_cast %244 : vector<128xf32> to vector<1x128xf32>
    %246 = tpu.reciprocal %245 : vector<1x128xf32> -> vector<1x128xf32>
    %247 = vector.extract_strided_slice %238 {offsets = [0, 0], sizes = [16, 128], strides = [1, 1]} : vector<32x128xf32> to vector<16x128xf32>
    %248 = vector.extract_strided_slice %243 {offsets = [0, 0], sizes = [1, 128], strides = [1, 1]} : vector<2x128xf32> to vector<1x128xf32>
    %249 = vector.broadcast %248 : vector<1x128xf32> to vector<16x128xf32>
    %250 = arith.mulf %247, %249 : vector<16x128xf32>
    %251 = vector.extract_strided_slice %238 {offsets = [16, 0], sizes = [16, 128], strides = [1, 1]} : vector<32x128xf32> to vector<16x128xf32>
    %252 = vector.extract_strided_slice %243 {offsets = [1, 0], sizes = [1, 128], strides = [1, 1]} : vector<2x128xf32> to vector<1x128xf32>
    %253 = vector.broadcast %252 : vector<1x128xf32> to vector<16x128xf32>
    %254 = arith.mulf %251, %253 : vector<16x128xf32>
    %255 = arith.addf %250, %254 : vector<16x128xf32>
    %256 = vector.broadcast %246 : vector<1x128xf32> to vector<16x128xf32>
    %257 = arith.mulf %255, %256 : vector<16x128xf32>
    %258 = vector.extract_strided_slice %236 {offsets = [2, 0], sizes = [3, 128], strides = [1, 1]} : vector<5x128xf32> to vector<3x128xf32>
    %259 = vector.extract_strided_slice %235 {offsets = [32, 0], sizes = [48, 128], strides = [1, 1]} : vector<80x128xf32> to vector<48x128xf32>
    %cst_82 = arith.constant dense<0xFF800000> : vector<128xf32>
    %260 = vector.multi_reduction <maximumf>, %258, %cst_82 [0] : vector<3x128xf32> to vector<128xf32>
    %261 = vector.shape_cast %260 : vector<128xf32> to vector<1x128xf32>
    %262 = vector.broadcast %261 : vector<1x128xf32> to vector<3x128xf32>
    %263 = arith.subf %258, %262 : vector<3x128xf32>
    %264 = math.exp %263 : vector<3x128xf32>
    %cst_83 = arith.constant dense<0.000000e+00> : vector<128xf32>
    %265 = vector.multi_reduction <add>, %264, %cst_83 [0] : vector<3x128xf32> to vector<128xf32>
    %266 = vector.shape_cast %265 : vector<128xf32> to vector<1x128xf32>
    %267 = tpu.reciprocal %266 : vector<1x128xf32> -> vector<1x128xf32>
    %268 = vector.extract_strided_slice %259 {offsets = [0, 0], sizes = [16, 128], strides = [1, 1]} : vector<48x128xf32> to vector<16x128xf32>
    %269 = vector.extract_strided_slice %264 {offsets = [0, 0], sizes = [1, 128], strides = [1, 1]} : vector<3x128xf32> to vector<1x128xf32>
    %270 = vector.broadcast %269 : vector<1x128xf32> to vector<16x128xf32>
    %271 = arith.mulf %268, %270 : vector<16x128xf32>
    %272 = vector.extract_strided_slice %259 {offsets = [16, 0], sizes = [16, 128], strides = [1, 1]} : vector<48x128xf32> to vector<16x128xf32>
    %273 = vector.extract_strided_slice %264 {offsets = [1, 0], sizes = [1, 128], strides = [1, 1]} : vector<3x128xf32> to vector<1x128xf32>
    %274 = vector.broadcast %273 : vector<1x128xf32> to vector<16x128xf32>
    %275 = arith.mulf %272, %274 : vector<16x128xf32>
    %276 = arith.addf %271, %275 : vector<16x128xf32>
    %277 = vector.extract_strided_slice %259 {offsets = [32, 0], sizes = [16, 128], strides = [1, 1]} : vector<48x128xf32> to vector<16x128xf32>
    %278 = vector.extract_strided_slice %264 {offsets = [2, 0], sizes = [1, 128], strides = [1, 1]} : vector<3x128xf32> to vector<1x128xf32>
    %279 = vector.broadcast %278 : vector<1x128xf32> to vector<16x128xf32>
    %280 = arith.mulf %277, %279 : vector<16x128xf32>
    %281 = arith.addf %276, %280 : vector<16x128xf32>
    %282 = vector.broadcast %267 : vector<1x128xf32> to vector<16x128xf32>
    %283 = arith.mulf %281, %282 : vector<16x128xf32>
    %284 = arith.mulf %257, %283 : vector<16x128xf32>
    %cst_84 = arith.constant dense<0.000000e+00> : vector<128xf32>
    %285 = vector.multi_reduction <add>, %284, %cst_84 [0] : vector<16x128xf32> to vector<128xf32>
    %286 = vector.shape_cast %285 : vector<128xf32> to vector<1x128xf32>
    %c0_85 = arith.constant 0 : index
    %c0_86 = arith.constant 0 : index
    %287 = vector.load %arg11[%c0_85, %c0_86] : memref<1x128xf32, #tpu.memory_space<vmem>>, vector<1x128xf32>
    tpu.vector_store %arg11[%c0_85, %c0_86], %286 {strides = array<i32>} : memref<1x128xf32, #tpu.memory_space<vmem>>, vector<1x128xf32>,
    return
  }
  func.func @transform_0(%arg0: i32) -> (i32, i32) {
    %c0_i32 = arith.constant 0 : i32
    %c0_i32_0 = arith.constant 0 : i32
    return %c0_i32, %arg0 : i32, i32
  }
  func.func @transform_1(%arg0: i32) -> (i32, i32) {
    %c0_i32 = arith.constant 0 : i32
    %c0_i32_0 = arith.constant 0 : i32
    %c0_i32_1 = arith.constant 0 : i32
    return %c0_i32, %c0_i32_0 : i32, i32
  }
  func.func @transform_2(%arg0: i32) -> (i32, i32, i32) {
    %c0_i32 = arith.constant 0 : i32
    %c0_i32_0 = arith.constant 0 : i32
    %c0_i32_1 = arith.constant 0 : i32
    %c0_i32_2 = arith.constant 0 : i32
    return %c0_i32, %c0_i32_0, %c0_i32_1 : i32, i32, i32
  }
  func.func @transform_3(%arg0: i32) -> (i32, i32, i32) {
    %c0_i32 = arith.constant 0 : i32
    %c0_i32_0 = arith.constant 0 : i32
    %c0_i32_1 = arith.constant 0 : i32
    %c0_i32_2 = arith.constant 0 : i32
    return %c0_i32, %c0_i32_0, %c0_i32_1 : i32, i32, i32
  }
  func.func @transform_4(%arg0: i32) -> (i32, i32, i32) {
    %c0_i32 = arith.constant 0 : i32
    %c0_i32_0 = arith.constant 0 : i32
    %c0_i32_1 = arith.constant 0 : i32
    %c0_i32_2 = arith.constant 0 : i32
    return %c0_i32, %c0_i32_0, %c0_i32_1 : i32, i32, i32
  }
  func.func @transform_5(%arg0: i32) -> (i32, i32, i32) {
    %c0_i32 = arith.constant 0 : i32
    %c0_i32_0 = arith.constant 0 : i32
    %c0_i32_1 = arith.constant 0 : i32
    %c0_i32_2 = arith.constant 0 : i32
    return %c0_i32, %c0_i32_0, %c0_i32_1 : i32, i32, i32
  }
  func.func @transform_6(%arg0: i32) -> (i32, i32, i32) {
    %c0_i32 = arith.constant 0 : i32
    %c0_i32_0 = arith.constant 0 : i32
    %c0_i32_1 = arith.constant 0 : i32
    %c0_i32_2 = arith.constant 0 : i32
    return %c0_i32, %c0_i32_0, %c0_i32_1 : i32, i32, i32
  }
  func.func @transform_7(%arg0: i32) -> (i32, i32, i32) {
    %c0_i32 = arith.constant 0 : i32
    %c0_i32_0 = arith.constant 0 : i32
    %c0_i32_1 = arith.constant 0 : i32
    %c0_i32_2 = arith.constant 0 : i32
    return %c0_i32, %c0_i32_0, %c0_i32_1 : i32, i32, i32
  }
  func.func @transform_8(%arg0: i32) -> (i32, i32) {
    %c0_i32 = arith.constant 0 : i32
    %c0_i32_0 = arith.constant 0 : i32
    %c0_i32_1 = arith.constant 0 : i32
    return %c0_i32, %c0_i32_0 : i32, i32
  }
  func.func @transform_9(%arg0: i32) -> (i32, i32) {
    %c0_i32 = arith.constant 0 : i32
    %c0_i32_0 = arith.constant 0 : i32
    %c0_i32_1 = arith.constant 0 : i32
    return %c0_i32, %c0_i32_0 : i32, i32
  }
  func.func @transform_10(%arg0: i32) -> (i32, i32) {
    %c0_i32 = arith.constant 0 : i32
    %c0_i32_0 = arith.constant 0 : i32
    return %c0_i32, %arg0 : i32, i32
  }
}

</mosaic_0001>

<llo_original>
// kernel: forward.1
$region0: #{forward.1}
  #allocation0 [shape = 'u32[]', space=smem, size = 0x4, offset = 0x4, fixed_abs, tag = 'smem constant byte address 0x4 - core index']
  #allocation1 [shape = 'u32[144,128]{1,0:T(1,128)}', space=vmem, size = 0x12000, scoped, tag = 'internal scratch']
  %s0 = inlined_call_operand.vmem [shape: f32[88,128], index: 0, kind: input, shape index: {}]
  %s1 = inlined_call_operand.vmem [shape: f32[160,88], index: 1, kind: input, shape index: {}]
  %s2 = inlined_call_operand.vmem [shape: f32[1,160,160], index: 2, kind: input, shape index: {}]
  %s3 = inlined_call_operand.vmem [shape: f32[1,160,160], index: 3, kind: input, shape index: {}]
  %s4 = inlined_call_operand.vmem [shape: f32[1,160,1], index: 4, kind: input, shape index: {}]
  %s5 = inlined_call_operand.vmem [shape: f32[1,160,1], index: 5, kind: input, shape index: {}]
  %s6 = inlined_call_operand.vmem [shape: f32[1,160,1], index: 6, kind: input, shape index: {}]
  %s7 = inlined_call_operand.vmem [shape: f32[1,160,1], index: 7, kind: input, shape index: {}]
  %s8 = inlined_call_operand.vmem [shape: f32[88,160], index: 8, kind: input, shape index: {}]
  %s9 = inlined_call_operand.vmem [shape: f32[88,1], index: 9, kind: input, shape index: {}]
  %s10 = inlined_call_operand.vmem [shape: f32[1,128], index: 10, kind: output, shape index: {}]
  %s11 = sld [smem:[#allocation0]]
  $region50: #{forward.1} parent=0
    _
  %s13 = ssub.s32 1, %s11
  %s14 = scalar_select 0, %s13, %s11
  // Predicated region
  $region2: #{forward.1} parent=0 // pred_check
    _
  $region3: #{forward.1} parent=0 // pred_check_branch
    %16 = sbr.rel (0) target = $region5
  $region4: #{forward.1} parent=0 // pred_region
    _
  $region5: #{forward.1} parent=0 // pred_fallthru
    _
  // Predicated region
  $region6: #{forward.1} parent=0 // pred_check
    _
  $region7: #{forward.1} parent=0 // pred_check_branch
    %18 = sbr.rel (0) target = $region9
  $region8: #{forward.1} parent=0 // pred_region
    _
  $region9: #{forward.1} parent=0 // pred_fallthru
    _
  // Predicated region
  $region10: #{forward.1} parent=0 // pred_check
    _
  $region11: #{forward.1} parent=0 // pred_check_branch
    %20 = sbr.rel (0) target = $region13
  $region12: #{forward.1} parent=0 // pred_region
    _
  $region13: #{forward.1} parent=0 // pred_fallthru
    _
  // Predicated region
  $region14: #{forward.1} parent=0 // pred_check
    _
  $region15: #{forward.1} parent=0 // pred_check_branch
    %22 = sbr.rel (0) target = $region17
  $region16: #{forward.1} parent=0 // pred_region
    _
  $region17: #{forward.1} parent=0 // pred_fallthru
    _
  // Predicated region
  $region18: #{forward.1} parent=0 // pred_check
    _
  $region19: #{forward.1} parent=0 // pred_check_branch
    %24 = sbr.rel (0) target = $region21
  $region20: #{forward.1} parent=0 // pred_region
    _
  $region21: #{forward.1} parent=0 // pred_fallthru
    _
  // Predicated region
  $region22: #{forward.1} parent=0 // pred_check
    _
  $region23: #{forward.1} parent=0 // pred_check_branch
    %26 = sbr.rel (0) target = $region25
  $region24: #{forward.1} parent=0 // pred_region
    _
  $region25: #{forward.1} parent=0 // pred_fallthru
    _
  // Predicated region
  $region26: #{forward.1} parent=0 // pred_check
    _
  $region27: #{forward.1} parent=0 // pred_check_branch
    %28 = sbr.rel (0) target = $region29
  $region28: #{forward.1} parent=0 // pred_region
    _
  $region29: #{forward.1} parent=0 // pred_fallthru
    _
  // Predicated region
  $region30: #{forward.1} parent=0 // pred_check
    _
  $region31: #{forward.1} parent=0 // pred_check_branch
    %30 = sbr.rel (0) target = $region33
  $region32: #{forward.1} parent=0 // pred_region
    _
  $region33: #{forward.1} parent=0 // pred_fallthru
    _
  // Predicated region
  $region34: #{forward.1} parent=0 // pred_check
    _
  $region35: #{forward.1} parent=0 // pred_check_branch
    %32 = sbr.rel (0) target = $region37
  $region36: #{forward.1} parent=0 // pred_region
    _
  $region37: #{forward.1} parent=0 // pred_fallthru
    _
  // Predicated region
  $region38: #{forward.1} parent=0 // pred_check
    _
  $region39: #{forward.1} parent=0 // pred_check_branch
    %34 = sbr.rel (0) target = $region41
  $region40: #{forward.1} parent=0 // pred_region
    _
  $region41: #{forward.1} parent=0 // pred_fallthru
    _
  %v35 = vld [vmem:[%s1] sm:$0xff]
  %v36 = vld [vmem:[%s1 + $0x8] sm:$0xff]
  %v37 = vld [vmem:[%s1 + $0x10] sm:$0xff]
  %v38 = vld [vmem:[%s1 + $0x18] sm:$0xff]
  %v39 = vld [vmem:[%s1 + $0x20] sm:$0xff]
  %v40 = vld [vmem:[%s1 + $0x28] sm:$0xff]
  %v41 = vld [vmem:[%s1 + $0x30] sm:$0xff]
  %v42 = vld [vmem:[%s1 + $0x38] sm:$0xff]
  %v43 = vld [vmem:[%s1 + $0x40] sm:$0xff]
  %v44 = vld [vmem:[%s1 + $0x48] sm:$0xff]
  %v45 = vld [vmem:[%s1 + $0x50] sm:$0xff]
  %v46 = vld [vmem:[%s1 + $0x58] sm:$0xff]
  %v47 = vld [vmem:[%s1 + $0x60] sm:$0xff]
  %v48 = vld [vmem:[%s1 + $0x68] sm:$0xff]
  %v49 = vld [vmem:[%s1 + $0x70] sm:$0xff]
  %v50 = vld [vmem:[%s1 + $0x78] sm:$0xff]
  %v51 = vld [vmem:[%s1 + $0x80] sm:$0xff]
  %v52 = vld [vmem:[%s1 + $0x88] sm:$0xff]
  %v53 = vld [vmem:[%s1 + $0x90] sm:$0xff]
  %v54 = vld [vmem:[%s1 + $0x98] sm:$0xff]
  %v55 = vld [vmem:[%s0] sm:$0xff]
  %v56 = vld [vmem:[%s0 + $0x8] sm:$0xff]
  %v57 = vld [vmem:[%s0 + $0x10] sm:$0xff]
  %v58 = vld [vmem:[%s0 + $0x18] sm:$0xff]
  %v59 = vld [vmem:[%s0 + $0x20] sm:$0xff]
  %v60 = vld [vmem:[%s0 + $0x28] sm:$0xff]
  %v61 = vld [vmem:[%s0 + $0x30] sm:$0xff]
  %v62 = vld [vmem:[%s0 + $0x38] sm:$0xff]
  %v63 = vld [vmem:[%s0 + $0x40] sm:$0xff]
  %v64 = vld [vmem:[%s0 + $0x48] sm:$0xff]
  %v65 = vld [vmem:[%s0 + $0x50] sm:$0xff]
  %vm66 = vcmask 719872
  %v68 = vsel %vm66, %v35, 0
  %v71 = vsel %vm66, %v36, 0
  %v74 = vsel %vm66, %v37, 0
  %v77 = vsel %vm66, %v38, 0
  %v80 = vsel %vm66, %v39, 0
  %v83 = vsel %vm66, %v40, 0
  %v86 = vsel %vm66, %v41, 0
  %v89 = vsel %vm66, %v42, 0
  %v92 = vsel %vm66, %v43, 0
  %v95 = vsel %vm66, %v44, 0
  %v98 = vsel %vm66, %v45, 0
  %v101 = vsel %vm66, %v46, 0
  %v104 = vsel %vm66, %v47, 0
  %v107 = vsel %vm66, %v48, 0
  %v110 = vsel %vm66, %v49, 0
  %v113 = vsel %vm66, %v50, 0
  %v116 = vsel %vm66, %v51, 0
  %v119 = vsel %vm66, %v52, 0
  %v122 = vsel %vm66, %v53, 0
  %v125 = vsel %vm66, %v54, 0
  %127 = vmatprep.subr.mxu0 0.0
  %128 = vmatpush1.msra.mxu0 %v55
  %129 = vmatprep.subr.mxu0 0.0
  %130 = vmatpush1.msra.mxu0 %v56
  %131 = vmatprep.subr.mxu0 0.0
  %132 = vmatpush1.msra.mxu0 %v57
  %133 = vmatprep.subr.mxu0 0.0
  %134 = vmatpush1.msra.mxu0 %v58
  %135 = vmatprep.subr.mxu0 0.0
  %136 = vmatpush1.msra.mxu0 %v59
  %137 = vmatprep.subr.mxu0 0.0
  %138 = vmatpush1.msra.mxu0 %v60
  %139 = vmatprep.subr.mxu0 0.0
  %140 = vmatpush1.msra.mxu0 %v61
  %141 = vmatprep.subr.mxu0 0.0
  %142 = vmatpush1.msra.mxu0 %v62
  %143 = vmatprep.subr.mxu0 0.0
  %144 = vmatpush1.msra.mxu0 %v63
  %145 = vmatprep.subr.mxu0 0.0
  %146 = vmatpush1.msra.mxu0 %v64
  %147 = vmatprep.subr.mxu0 0.0
  %148 = vmatpush1.msra.mxu0 %v65
  %149 = vmatprep.subr.mxu0 0.0
  %150 = vmatpush1.msra.mxu0 0.0
  %151 = vmatprep.subr.mxu0 0.0
  %152 = vmatpush1.msra.mxu0 0.0
  %153 = vmatprep.subr.mxu0 0.0
  %154 = vmatpush1.msra.mxu0 0.0
  %155 = vmatprep.subr.mxu0 0.0
  %156 = vmatpush1.msra.mxu0 0.0
  %157 = vmatprep.subr.mxu0 0.0
  %158 = vmatpush1.msra.mxu0 0.0
  %159 = vmatprep.subr.mxu0 0.0
  %160 = vmatpush1.msra.mxu0 0.0
  %161 = vmatprep.subr.mxu0 0.0
  %162 = vmatpush1.msra.mxu0 0.0
  %163 = vmatprep.subr.mxu0 0.0
  %164 = vmatpush1.msra.mxu0 0.0
  %165 = vmatprep.subr.mxu0 0.0
  %166 = vmatpush1.msra.mxu0 0.0
  %167 = vmatprep.subr.mxu0 0.0
  %168 = vmatpush1.msra.mxu0 0.0
  %169 = vmatprep.subr.mxu0 0.0
  %170 = vmatpush1.msra.mxu0 0.0
  %171 = vmatprep.subr.mxu0 0.0
  %172 = vmatpush1.msra.mxu0 0.0
  %173 = vmatprep.subr.mxu0 0.0
  %174 = vmatpush1.msra.mxu0 0.0
  %175 = vmatprep.subr.mxu0 0.0
  %176 = vmatpush1.msra.mxu0 0.0
  %177 = vmatprep.subr.mxu0 0.0
  %178 = vmatpush1.msra.mxu0 0.0
  %179 = vmatprep.subr.mxu0 0.0
  %180 = vmatpush1.msra.mxu0 0.0
  %181 = vmatprep.subr.mxu0 0.0
  %182 = vmatpush1.msra.mxu0 0.0
  %183 = vmatprep.subr.mxu0 0.0
  %184 = vmatpush1.msra.mxu0 0.0
  %185 = vmatprep.subr.mxu0 0.0
  %186 = vmatpush1.msra.mxu0 0.0
  %187 = vmatprep.subr.mxu0 0.0
  %188 = vmatpush1.msra.mxu0 0.0
  %189 = vmatprep.subr.mxu0 0.0
  %190 = vmatpush1.msra.mxu0 0.0
  %191 = vmatprep.mubr.f32.mxu0 0.0
  %192 = vmatmul.mubr.f32.gmra.mrb[0].mxu0 %v68
  %v193 = vpop.f32.mrb[0].mxu0
  %v194 = vadd.f32 0.0, %v193
  %v195 = vpop.f32.mrb[0].mxu0
  %196 = vmatprep.mubr.f32.mxu0 0.0
  %197 = vmatmul.mubr.f32.gmra.mrb[0].mxu0 %v71
  %v198 = vpop.f32.mrb[0].mxu0
  %v199 = vadd.f32 0.0, %v198
  %v200 = vpop.f32.mrb[0].mxu0
  %201 = vmatprep.mubr.f32.mxu0 0.0
  %202 = vmatmul.mubr.f32.gmra.mrb[0].mxu0 %v74
  %v203 = vpop.f32.mrb[0].mxu0
  %v204 = vadd.f32 0.0, %v203
  %v205 = vpop.f32.mrb[0].mxu0
  %206 = vmatprep.mubr.f32.mxu0 0.0
  %207 = vmatmul.mubr.f32.gmra.mrb[0].mxu0 %v77
  %v208 = vpop.f32.mrb[0].mxu0
  %v209 = vadd.f32 0.0, %v208
  %v210 = vpop.f32.mrb[0].mxu0
  %211 = vmatprep.mubr.f32.mxu0 0.0
  %212 = vmatmul.mubr.f32.gmra.mrb[0].mxu0 %v80
  %v213 = vpop.f32.mrb[0].mxu0
  %v214 = vadd.f32 0.0, %v213
  %v215 = vpop.f32.mrb[0].mxu0
  %216 = vmatprep.mubr.f32.mxu0 0.0
  %217 = vmatmul.mubr.f32.gmra.mrb[0].mxu0 %v83
  %v218 = vpop.f32.mrb[0].mxu0
  %v219 = vadd.f32 0.0, %v218
  %v220 = vpop.f32.mrb[0].mxu0
  %221 = vmatprep.mubr.f32.mxu0 0.0
  %222 = vmatmul.mubr.f32.gmra.mrb[0].mxu0 %v86
  %v223 = vpop.f32.mrb[0].mxu0
  %v224 = vadd.f32 0.0, %v223
  %v225 = vpop.f32.mrb[0].mxu0
  %226 = vmatprep.mubr.f32.mxu0 0.0
  %227 = vmatmul.mubr.f32.gmra.mrb[0].mxu0 %v89
  %v228 = vpop.f32.mrb[0].mxu0
  %v229 = vadd.f32 0.0, %v228
  %v230 = vpop.f32.mrb[0].mxu0
  %231 = vmatprep.mubr.f32.mxu0 0.0
  %232 = vmatmul.mubr.f32.gmra.mrb[0].mxu0 %v92
  %v233 = vpop.f32.mrb[0].mxu0
  %v234 = vadd.f32 0.0, %v233
  %v235 = vpop.f32.mrb[0].mxu0
  %236 = vmatprep.mubr.f32.mxu0 0.0
  %237 = vmatmul.mubr.f32.gmra.mrb[0].mxu0 %v95
  %v238 = vpop.f32.mrb[0].mxu0
  %v239 = vadd.f32 0.0, %v238
  %v240 = vpop.f32.mrb[0].mxu0
  %241 = vmatprep.mubr.f32.mxu0 0.0
  %242 = vmatmul.mubr.f32.gmra.mrb[0].mxu0 %v98
  %v243 = vpop.f32.mrb[0].mxu0
  %v244 = vadd.f32 0.0, %v243
  %v245 = vpop.f32.mrb[0].mxu0
  %246 = vmatprep.mubr.f32.mxu0 0.0
  %247 = vmatmul.mubr.f32.gmra.mrb[0].mxu0 %v101
  %v248 = vpop.f32.mrb[0].mxu0
  %v249 = vadd.f32 0.0, %v248
  %v250 = vpop.f32.mrb[0].mxu0
  %251 = vmatprep.mubr.f32.mxu0 0.0
  %252 = vmatmul.mubr.f32.gmra.mrb[0].mxu0 %v104
  %v253 = vpop.f32.mrb[0].mxu0
  %v254 = vadd.f32 0.0, %v253
  %v255 = vpop.f32.mrb[0].mxu0
  %256 = vmatprep.mubr.f32.mxu0 0.0
  %257 = vmatmul.mubr.f32.gmra.mrb[0].mxu0 %v107
  %v258 = vpop.f32.mrb[0].mxu0
  %v259 = vadd.f32 0.0, %v258
  %v260 = vpop.f32.mrb[0].mxu0
  %261 = vmatprep.mubr.f32.mxu0 0.0
  %262 = vmatmul.mubr.f32.gmra.mrb[0].mxu0 %v110
  %v263 = vpop.f32.mrb[0].mxu0
  %v264 = vadd.f32 0.0, %v263
  %v265 = vpop.f32.mrb[0].mxu0
  %266 = vmatprep.mubr.f32.mxu0 0.0
  %267 = vmatmul.mubr.f32.gmra.mrb[0].mxu0 %v113
  %v268 = vpop.f32.mrb[0].mxu0
  %v269 = vadd.f32 0.0, %v268
  %v270 = vpop.f32.mrb[0].mxu0
  %271 = vmatprep.mubr.f32.mxu0 0.0
  %272 = vmatmul.mubr.f32.gmra.mrb[0].mxu0 %v116
  %v273 = vpop.f32.mrb[0].mxu0
  %v274 = vadd.f32 0.0, %v273
  %v275 = vpop.f32.mrb[0].mxu0
  %276 = vmatprep.mubr.f32.mxu0 0.0
  %277 = vmatmul.mubr.f32.gmra.mrb[0].mxu0 %v119
  %v278 = vpop.f32.mrb[0].mxu0
  %v279 = vadd.f32 0.0, %v278
  %v280 = vpop.f32.mrb[0].mxu0
  %281 = vmatprep.mubr.f32.mxu0 0.0
  %282 = vmatmul.mubr.f32.gmra.mrb[0].mxu0 %v122
  %v283 = vpop.f32.mrb[0].mxu0
  %v284 = vadd.f32 0.0, %v283
  %v285 = vpop.f32.mrb[0].mxu0
  %286 = vmatprep.mubr.f32.mxu0 0.0
  %287 = vmatmul.mubr.f32.gmra.mrb[0].mxu0 %v125
  %v288 = vpop.f32.mrb[0].mxu0
  %v289 = vadd.f32 0.0, %v288
  %v290 = vpop.f32.mrb[0].mxu0
  %291 = vdwg.mxu0
  %v292 = vxor.u32 %v194, 2147483648
  %v293 = vxor.u32 %v199, 2147483648
  %v294 = vxor.u32 %v204, 2147483648
  %v295 = vxor.u32 %v209, 2147483648
  %v296 = vxor.u32 %v214, 2147483648
  %v297 = vxor.u32 %v219, 2147483648
  %v298 = vxor.u32 %v224, 2147483648
  %v299 = vxor.u32 %v229, 2147483648
  %v300 = vxor.u32 %v234, 2147483648
  %v301 = vxor.u32 %v239, 2147483648
  %v302 = vxor.u32 %v244, 2147483648
  %v303 = vxor.u32 %v249, 2147483648
  %v304 = vxor.u32 %v254, 2147483648
  %v305 = vxor.u32 %v259, 2147483648
  %v306 = vxor.u32 %v264, 2147483648
  %v307 = vxor.u32 %v269, 2147483648
  %v308 = vxor.u32 %v274, 2147483648
  %v309 = vxor.u32 %v279, 2147483648
  %v310 = vxor.u32 %v284, 2147483648
  %v311 = vxor.u32 %v289, 2147483648
  %v312 = vmul.f32 %v292, 1.442695
  %v313 = vpow.pop %v312
  %v314 = vmul.f32 %v293, 1.442695
  %v315 = vpow.pop %v314
  %v316 = vmul.f32 %v294, 1.442695
  %v317 = vpow.pop %v316
  %v318 = vmul.f32 %v295, 1.442695
  %v319 = vpow.pop %v318
  %v320 = vmul.f32 %v296, 1.442695
  %v321 = vpow.pop %v320
  %v322 = vmul.f32 %v297, 1.442695
  %v323 = vpow.pop %v322
  %v324 = vmul.f32 %v298, 1.442695
  %v325 = vpow.pop %v324
  %v326 = vmul.f32 %v299, 1.442695
  %v327 = vpow.pop %v326
  %v328 = vmul.f32 %v300, 1.442695
  %v329 = vpow.pop %v328
  %v330 = vmul.f32 %v301, 1.442695
  %v331 = vpow.pop %v330
  %v332 = vmul.f32 %v302, 1.442695
  %v333 = vpow.pop %v332
  %v334 = vmul.f32 %v303, 1.442695
  %v335 = vpow.pop %v334
  %v336 = vmul.f32 %v304, 1.442695
  %v337 = vpow.pop %v336
  %v338 = vmul.f32 %v305, 1.442695
  %v339 = vpow.pop %v338
  %v340 = vmul.f32 %v306, 1.442695
  %v341 = vpow.pop %v340
  %v342 = vmul.f32 %v307, 1.442695
  %v343 = vpow.pop %v342
  %v344 = vmul.f32 %v308, 1.442695
  %v345 = vpow.pop %v344
  %v346 = vmul.f32 %v309, 1.442695
  %v347 = vpow.pop %v346
  %v348 = vmul.f32 %v310, 1.442695
  %v349 = vpow.pop %v348
  %v350 = vmul.f32 %v311, 1.442695
  %v351 = vpow.pop %v350
  %v352 = vadd.f32 %v313, 1.0
  %v353 = vadd.f32 %v315, 1.0
  %v354 = vadd.f32 %v317, 1.0
  %v355 = vadd.f32 %v319, 1.0
  %v356 = vadd.f32 %v321, 1.0
  %v357 = vadd.f32 %v323, 1.0
  %v358 = vadd.f32 %v325, 1.0
  %v359 = vadd.f32 %v327, 1.0
  %v360 = vadd.f32 %v329, 1.0
  %v361 = vadd.f32 %v331, 1.0
  %v362 = vadd.f32 %v333, 1.0
  %v363 = vadd.f32 %v335, 1.0
  %v364 = vadd.f32 %v337, 1.0
  %v365 = vadd.f32 %v339, 1.0
  %v366 = vadd.f32 %v341, 1.0
  %v367 = vadd.f32 %v343, 1.0
  %v368 = vadd.f32 %v345, 1.0
  %v369 = vadd.f32 %v347, 1.0
  %v370 = vadd.f32 %v349, 1.0
  %v371 = vadd.f32 %v351, 1.0
  %v372 = vrcp.pop %v352
  %v373 = vmul.f32 1.0, %v372
  %v374 = vrcp.pop %v353
  %v375 = vmul.f32 1.0, %v374
  %v376 = vrcp.pop %v354
  %v377 = vmul.f32 1.0, %v376
  %v378 = vrcp.pop %v355
  %v379 = vmul.f32 1.0, %v378
  %v380 = vrcp.pop %v356
  %v381 = vmul.f32 1.0, %v380
  %v382 = vrcp.pop %v357
  %v383 = vmul.f32 1.0, %v382
  %v384 = vrcp.pop %v358
  %v385 = vmul.f32 1.0, %v384
  %v386 = vrcp.pop %v359
  %v387 = vmul.f32 1.0, %v386
  %v388 = vrcp.pop %v360
  %v389 = vmul.f32 1.0, %v388
  %v390 = vrcp.pop %v361
  %v391 = vmul.f32 1.0, %v390
  %v392 = vrcp.pop %v362
  %v393 = vmul.f32 1.0, %v392
  %v394 = vrcp.pop %v363
  %v395 = vmul.f32 1.0, %v394
  %v396 = vrcp.pop %v364
  %v397 = vmul.f32 1.0, %v396
  %v398 = vrcp.pop %v365
  %v399 = vmul.f32 1.0, %v398
  %v400 = vrcp.pop %v366
  %v401 = vmul.f32 1.0, %v400
  %v402 = vrcp.pop %v367
  %v403 = vmul.f32 1.0, %v402
  %v404 = vrcp.pop %v368
  %v405 = vmul.f32 1.0, %v404
  %v406 = vrcp.pop %v369
  %v407 = vmul.f32 1.0, %v406
  %v408 = vrcp.pop %v370
  %v409 = vmul.f32 1.0, %v408
  %v410 = vrcp.pop %v371
  %v411 = vmul.f32 1.0, %v410
  %v412 = vmul.f32 %v194, %v373
  %v413 = vmul.f32 %v199, %v375
  %v414 = vmul.f32 %v204, %v377
  %v415 = vmul.f32 %v209, %v379
  %v416 = vmul.f32 %v214, %v381
  %v417 = vmul.f32 %v219, %v383
  %v418 = vmul.f32 %v224, %v385
  %v419 = vmul.f32 %v229, %v387
  %v420 = vmul.f32 %v234, %v389
  %v421 = vmul.f32 %v239, %v391
  %v422 = vmul.f32 %v244, %v393
  %v423 = vmul.f32 %v249, %v395
  %v424 = vmul.f32 %v254, %v397
  %v425 = vmul.f32 %v259, %v399
  %v426 = vmul.f32 %v264, %v401
  %v427 = vmul.f32 %v269, %v403
  %v428 = vmul.f32 %v274, %v405
  %v429 = vmul.f32 %v279, %v407
  %v430 = vmul.f32 %v284, %v409
  %v431 = vmul.f32 %v289, %v411
  %v432 = vld [vmem:[%s4] sm:$0xff]
  %v433 = vld [vmem:[%s4 + $0x8] sm:$0xff]
  %v434 = vld [vmem:[%s4 + $0x10] sm:$0xff]
  %v435 = vld [vmem:[%s4 + $0x18] sm:$0xff]
  %v436 = vld [vmem:[%s4 + $0x20] sm:$0xff]
  %v437 = vld [vmem:[%s4 + $0x28] sm:$0xff]
  %v438 = vld [vmem:[%s4 + $0x30] sm:$0xff]
  %v439 = vld [vmem:[%s4 + $0x38] sm:$0xff]
  %v440 = vld [vmem:[%s4 + $0x40] sm:$0xff]
  %v441 = vld [vmem:[%s4 + $0x48] sm:$0xff]
  %v442 = vld [vmem:[%s4 + $0x50] sm:$0xff]
  %v443 = vld [vmem:[%s4 + $0x58] sm:$0xff]
  %v444 = vld [vmem:[%s4 + $0x60] sm:$0xff]
  %v445 = vld [vmem:[%s4 + $0x68] sm:$0xff]
  %v446 = vld [vmem:[%s4 + $0x70] sm:$0xff]
  %v447 = vld [vmem:[%s4 + $0x78] sm:$0xff]
  %v448 = vld [vmem:[%s4 + $0x80] sm:$0xff]
  %v449 = vld [vmem:[%s4 + $0x88] sm:$0xff]
  %v450 = vld [vmem:[%s4 + $0x90] sm:$0xff]
  %v451 = vld [vmem:[%s4 + $0x98] sm:$0xff]
  %v452 = vld [vmem:[%s5] sm:$0xff]
  %v453 = vld [vmem:[%s5 + $0x8] sm:$0xff]
  %v454 = vld [vmem:[%s5 + $0x10] sm:$0xff]
  %v455 = vld [vmem:[%s5 + $0x18] sm:$0xff]
  %v456 = vld [vmem:[%s5 + $0x20] sm:$0xff]
  %v457 = vld [vmem:[%s5 + $0x28] sm:$0xff]
  %v458 = vld [vmem:[%s5 + $0x30] sm:$0xff]
  %v459 = vld [vmem:[%s5 + $0x38] sm:$0xff]
  %v460 = vld [vmem:[%s5 + $0x40] sm:$0xff]
  %v461 = vld [vmem:[%s5 + $0x48] sm:$0xff]
  %v462 = vld [vmem:[%s5 + $0x50] sm:$0xff]
  %v463 = vld [vmem:[%s5 + $0x58] sm:$0xff]
  %v464 = vld [vmem:[%s5 + $0x60] sm:$0xff]
  %v465 = vld [vmem:[%s5 + $0x68] sm:$0xff]
  %v466 = vld [vmem:[%s5 + $0x70] sm:$0xff]
  %v467 = vld [vmem:[%s5 + $0x78] sm:$0xff]
  %v468 = vld [vmem:[%s5 + $0x80] sm:$0xff]
  %v469 = vld [vmem:[%s5 + $0x88] sm:$0xff]
  %v470 = vld [vmem:[%s5 + $0x90] sm:$0xff]
  %v471 = vld [vmem:[%s5 + $0x98] sm:$0xff]
  %v472 = vadd.f32 %v412, %v413
  %v473 = vadd.f32 %v472, %v414
  %v474 = vadd.f32 %v473, %v415
  %v475 = vrot.slane %v474, 4
  %v476 = vadd.f32 %v474, %v475
  %v477 = vrot.slane %v476, 2
  %v478 = vadd.f32 %v476, %v477
  %v479 = vrot.slane %v478, 1
  %v480 = vadd.f32 %v478, %v479
  %v481 = vrcp.pop 32.0
  %v482 = vmul.f32 %v480, %v481
  %v483 = vsub.f32 %v412, %v482
  %v484 = vsub.f32 %v413, %v482
  %v485 = vsub.f32 %v414, %v482
  %v486 = vsub.f32 %v415, %v482
  %v487 = vmul.f32 %v483, %v483
  %v488 = vmul.f32 %v484, %v484
  %v489 = vmul.f32 %v485, %v485
  %v490 = vmul.f32 %v486, %v486
  %v491 = vadd.f32 %v487, %v488
  %v492 = vadd.f32 %v491, %v489
  %v493 = vadd.f32 %v492, %v490
  %v494 = vrot.slane %v493, 4
  %v495 = vadd.f32 %v493, %v494
  %v496 = vrot.slane %v495, 2
  %v497 = vadd.f32 %v495, %v496
  %v498 = vrot.slane %v497, 1
  %v499 = vadd.f32 %v497, %v498
  %v500 = vmul.f32 %v499, %v481
  %v501 = vadd.f32 %v500, 1e-05
  %v502 = vrsqrt.pop %v501
  %v503 = vmul.f32 %v483, %v502
  %v504 = vmul.f32 %v484, %v502
  %v505 = vmul.f32 %v485, %v502
  %v506 = vmul.f32 %v486, %v502
  %v507 = vadd.f32 %v416, %v417
  %v508 = vadd.f32 %v507, %v418
  %v509 = vadd.f32 %v508, %v419
  %v510 = vrot.slane %v509, 4
  %v511 = vadd.f32 %v509, %v510
  %v512 = vrot.slane %v511, 2
  %v513 = vadd.f32 %v511, %v512
  %v514 = vrot.slane %v513, 1
  %v515 = vadd.f32 %v513, %v514
  %v516 = vmul.f32 %v515, %v481
  %v517 = vsub.f32 %v416, %v516
  %v518 = vsub.f32 %v417, %v516
  %v519 = vsub.f32 %v418, %v516
  %v520 = vsub.f32 %v419, %v516
  %v521 = vmul.f32 %v517, %v517
  %v522 = vmul.f32 %v518, %v518
  %v523 = vmul.f32 %v519, %v519
  %v524 = vmul.f32 %v520, %v520
  %v525 = vadd.f32 %v521, %v522
  %v526 = vadd.f32 %v525, %v523
  %v527 = vadd.f32 %v526, %v524
  %v528 = vrot.slane %v527, 4
  %v529 = vadd.f32 %v527, %v528
  %v530 = vrot.slane %v529, 2
  %v531 = vadd.f32 %v529, %v530
  %v532 = vrot.slane %v531, 1
  %v533 = vadd.f32 %v531, %v532
  %v534 = vmul.f32 %v533, %v481
  %v535 = vadd.f32 %v534, 1e-05
  %v536 = vrsqrt.pop %v535
  %v537 = vmul.f32 %v517, %v536
  %v538 = vmul.f32 %v518, %v536
  %v539 = vmul.f32 %v519, %v536
  %v540 = vmul.f32 %v520, %v536
  %v541 = vadd.f32 %v420, %v421
  %v542 = vadd.f32 %v541, %v422
  %v543 = vadd.f32 %v542, %v423
  %v544 = vrot.slane %v543, 4
  %v545 = vadd.f32 %v543, %v544
  %v546 = vrot.slane %v545, 2
  %v547 = vadd.f32 %v545, %v546
  %v548 = vrot.slane %v547, 1
  %v549 = vadd.f32 %v547, %v548
  %v550 = vmul.f32 %v549, %v481
  %v551 = vsub.f32 %v420, %v550
  %v552 = vsub.f32 %v421, %v550
  %v553 = vsub.f32 %v422, %v550
  %v554 = vsub.f32 %v423, %v550
  %v555 = vmul.f32 %v551, %v551
  %v556 = vmul.f32 %v552, %v552
  %v557 = vmul.f32 %v553, %v553
  %v558 = vmul.f32 %v554, %v554
  %v559 = vadd.f32 %v555, %v556
  %v560 = vadd.f32 %v559, %v557
  %v561 = vadd.f32 %v560, %v558
  %v562 = vrot.slane %v561, 4
  %v563 = vadd.f32 %v561, %v562
  %v564 = vrot.slane %v563, 2
  %v565 = vadd.f32 %v563, %v564
  %v566 = vrot.slane %v565, 1
  %v567 = vadd.f32 %v565, %v566
  %v568 = vmul.f32 %v567, %v481
  %v569 = vadd.f32 %v568, 1e-05
  %v570 = vrsqrt.pop %v569
  %v571 = vmul.f32 %v551, %v570
  %v572 = vmul.f32 %v552, %v570
  %v573 = vmul.f32 %v553, %v570
  %v574 = vmul.f32 %v554, %v570
  %v575 = vadd.f32 %v424, %v425
  %v576 = vadd.f32 %v575, %v426
  %v577 = vadd.f32 %v576, %v427
  %v578 = vrot.slane %v577, 4
  %v579 = vadd.f32 %v577, %v578
  %v580 = vrot.slane %v579, 2
  %v581 = vadd.f32 %v579, %v580
  %v582 = vrot.slane %v581, 1
  %v583 = vadd.f32 %v581, %v582
  %v584 = vmul.f32 %v583, %v481
  %v585 = vsub.f32 %v424, %v584
  %v586 = vsub.f32 %v425, %v584
  %v587 = vsub.f32 %v426, %v584
  %v588 = vsub.f32 %v427, %v584
  %v589 = vmul.f32 %v585, %v585
  %v590 = vmul.f32 %v586, %v586
  %v591 = vmul.f32 %v587, %v587
  %v592 = vmul.f32 %v588, %v588
  %v593 = vadd.f32 %v589, %v590
  %v594 = vadd.f32 %v593, %v591
  %v595 = vadd.f32 %v594, %v592
  %v596 = vrot.slane %v595, 4
  %v597 = vadd.f32 %v595, %v596
  %v598 = vrot.slane %v597, 2
  %v599 = vadd.f32 %v597, %v598
  %v600 = vrot.slane %v599, 1
  %v601 = vadd.f32 %v599, %v600
  %v602 = vmul.f32 %v601, %v481
  %v603 = vadd.f32 %v602, 1e-05
  %v604 = vrsqrt.pop %v603
  %v605 = vmul.f32 %v585, %v604
  %v606 = vmul.f32 %v586, %v604
  %v607 = vmul.f32 %v587, %v604
  %v608 = vmul.f32 %v588, %v604
  %v609 = vadd.f32 %v428, %v429
  %v610 = vadd.f32 %v609, %v430
  %v611 = vadd.f32 %v610, %v431
  %v612 = vrot.slane %v611, 4
  %v613 = vadd.f32 %v611, %v612
  %v614 = vrot.slane %v613, 2
  %v615 = vadd.f32 %v613, %v614
  %v616 = vrot.slane %v615, 1
  %v617 = vadd.f32 %v615, %v616
  %v618 = vmul.f32 %v617, %v481
  %v619 = vsub.f32 %v428, %v618
  %v620 = vsub.f32 %v429, %v618
  %v621 = vsub.f32 %v430, %v618
  %v622 = vsub.f32 %v431, %v618
  %v623 = vmul.f32 %v619, %v619
  %v624 = vmul.f32 %v620, %v620
  %v625 = vmul.f32 %v621, %v621
  %v626 = vmul.f32 %v622, %v622
  %v627 = vadd.f32 %v623, %v624
  %v628 = vadd.f32 %v627, %v625
  %v629 = vadd.f32 %v628, %v626
  %v630 = vrot.slane %v629, 4
  %v631 = vadd.f32 %v629, %v630
  %v632 = vrot.slane %v631, 2
  %v633 = vadd.f32 %v631, %v632
  %v634 = vrot.slane %v633, 1
  %v635 = vadd.f32 %v633, %v634
  %v636 = vmul.f32 %v635, %v481
  %v637 = vadd.f32 %v636, 1e-05
  %v638 = vrsqrt.pop %v637
  %v639 = vmul.f32 %v619, %v638
  %v640 = vmul.f32 %v620, %v638
  %v641 = vmul.f32 %v621, %v638
  %v642 = vmul.f32 %v622, %v638
  %644 = vset.pattern.permute.xlu0 0
  %645 = vperm.xlu0 %644, %v432
  %v646 = vpop.permute.xlu0 %645
  %649 = vset.pattern.permute.xlu0 0
  %650 = vperm.xlu0 %649, %v433
  %v651 = vpop.permute.xlu0 %650
  %654 = vset.pattern.permute.xlu0 0
  %655 = vperm.xlu0 %654, %v434
  %v656 = vpop.permute.xlu0 %655
  %659 = vset.pattern.permute.xlu0 0
  %660 = vperm.xlu0 %659, %v435
  %v661 = vpop.permute.xlu0 %660
  %664 = vset.pattern.permute.xlu0 0
  %665 = vperm.xlu0 %664, %v436
  %v666 = vpop.permute.xlu0 %665
  %669 = vset.pattern.permute.xlu0 0
  %670 = vperm.xlu0 %669, %v437
  %v671 = vpop.permute.xlu0 %670
  %674 = vset.pattern.permute.xlu0 0
  %675 = vperm.xlu0 %674, %v438
  %v676 = vpop.permute.xlu0 %675
  %679 = vset.pattern.permute.xlu0 0
  %680 = vperm.xlu0 %679, %v439
  %v681 = vpop.permute.xlu0 %680
  %684 = vset.pattern.permute.xlu0 0
  %685 = vperm.xlu0 %684, %v440
  %v686 = vpop.permute.xlu0 %685
  %689 = vset.pattern.permute.xlu0 0
  %690 = vperm.xlu0 %689, %v441
  %v691 = vpop.permute.xlu0 %690
  %694 = vset.pattern.permute.xlu0 0
  %695 = vperm.xlu0 %694, %v442
  %v696 = vpop.permute.xlu0 %695
  %699 = vset.pattern.permute.xlu0 0
  %700 = vperm.xlu0 %699, %v443
  %v701 = vpop.permute.xlu0 %700
  %704 = vset.pattern.permute.xlu0 0
  %705 = vperm.xlu0 %704, %v444
  %v706 = vpop.permute.xlu0 %705
  %709 = vset.pattern.permute.xlu0 0
  %710 = vperm.xlu0 %709, %v445
  %v711 = vpop.permute.xlu0 %710
  %714 = vset.pattern.permute.xlu0 0
  %715 = vperm.xlu0 %714, %v446
  %v716 = vpop.permute.xlu0 %715
  %719 = vset.pattern.permute.xlu0 0
  %720 = vperm.xlu0 %719, %v447
  %v721 = vpop.permute.xlu0 %720
  %724 = vset.pattern.permute.xlu0 0
  %725 = vperm.xlu0 %724, %v448
  %v726 = vpop.permute.xlu0 %725
  %729 = vset.pattern.permute.xlu0 0
  %730 = vperm.xlu0 %729, %v449
  %v731 = vpop.permute.xlu0 %730
  %734 = vset.pattern.permute.xlu0 0
  %735 = vperm.xlu0 %734, %v450
  %v736 = vpop.permute.xlu0 %735
  %739 = vset.pattern.permute.xlu0 0
  %740 = vperm.xlu0 %739, %v451
  %v741 = vpop.permute.xlu0 %740
  %v743 = vmul.f32 %v503, %v646
  %v744 = vmul.f32 %v504, %v651
  %v745 = vmul.f32 %v505, %v656
  %v746 = vmul.f32 %v506, %v661
  %v747 = vmul.f32 %v537, %v666
  %v748 = vmul.f32 %v538, %v671
  %v749 = vmul.f32 %v539, %v676
  %v750 = vmul.f32 %v540, %v681
  %v751 = vmul.f32 %v571, %v686
  %v752 = vmul.f32 %v572, %v691
  %v753 = vmul.f32 %v573, %v696
  %v754 = vmul.f32 %v574, %v701
  %v755 = vmul.f32 %v605, %v706
  %v756 = vmul.f32 %v606, %v711
  %v757 = vmul.f32 %v607, %v716
  %v758 = vmul.f32 %v608, %v721
  %v759 = vmul.f32 %v639, %v726
  %v760 = vmul.f32 %v640, %v731
  %v761 = vmul.f32 %v641, %v736
  %v762 = vmul.f32 %v642, %v741
  %764 = vset.pattern.permute.xlu0 0
  %765 = vperm.xlu0 %764, %v452
  %v766 = vpop.permute.xlu0 %765
  %769 = vset.pattern.permute.xlu0 0
  %770 = vperm.xlu0 %769, %v453
  %v771 = vpop.permute.xlu0 %770
  %774 = vset.pattern.permute.xlu0 0
  %775 = vperm.xlu0 %774, %v454
  %v776 = vpop.permute.xlu0 %775
  %779 = vset.pattern.permute.xlu0 0
  %780 = vperm.xlu0 %779, %v455
  %v781 = vpop.permute.xlu0 %780
  %784 = vset.pattern.permute.xlu0 0
  %785 = vperm.xlu0 %784, %v456
  %v786 = vpop.permute.xlu0 %785
  %789 = vset.pattern.permute.xlu0 0
  %790 = vperm.xlu0 %789, %v457
  %v791 = vpop.permute.xlu0 %790
  %794 = vset.pattern.permute.xlu0 0
  %795 = vperm.xlu0 %794, %v458
  %v796 = vpop.permute.xlu0 %795
  %799 = vset.pattern.permute.xlu0 0
  %800 = vperm.xlu0 %799, %v459
  %v801 = vpop.permute.xlu0 %800
  %804 = vset.pattern.permute.xlu0 0
  %805 = vperm.xlu0 %804, %v460
  %v806 = vpop.permute.xlu0 %805
  %809 = vset.pattern.permute.xlu0 0
  %810 = vperm.xlu0 %809, %v461
  %v811 = vpop.permute.xlu0 %810
  %814 = vset.pattern.permute.xlu0 0
  %815 = vperm.xlu0 %814, %v462
  %v816 = vpop.permute.xlu0 %815
  %819 = vset.pattern.permute.xlu0 0
  %820 = vperm.xlu0 %819, %v463
  %v821 = vpop.permute.xlu0 %820
  %824 = vset.pattern.permute.xlu0 0
  %825 = vperm.xlu0 %824, %v464
  %v826 = vpop.permute.xlu0 %825
  %829 = vset.pattern.permute.xlu0 0
  %830 = vperm.xlu0 %829, %v465
  %v831 = vpop.permute.xlu0 %830
  %834 = vset.pattern.permute.xlu0 0
  %835 = vperm.xlu0 %834, %v466
  %v836 = vpop.permute.xlu0 %835
  %839 = vset.pattern.permute.xlu0 0
  %840 = vperm.xlu0 %839, %v467
  %v841 = vpop.permute.xlu0 %840
  %844 = vset.pattern.permute.xlu0 0
  %845 = vperm.xlu0 %844, %v468
  %v846 = vpop.permute.xlu0 %845
  %849 = vset.pattern.permute.xlu0 0
  %850 = vperm.xlu0 %849, %v469
  %v851 = vpop.permute.xlu0 %850
  %854 = vset.pattern.permute.xlu0 0
  %855 = vperm.xlu0 %854, %v470
  %v856 = vpop.permute.xlu0 %855
  %859 = vset.pattern.permute.xlu0 0
  %860 = vperm.xlu0 %859, %v471
  %v861 = vpop.permute.xlu0 %860
  %v863 = vadd.f32 %v743, %v766
  %v864 = vadd.f32 %v744, %v771
  %v865 = vadd.f32 %v745, %v776
  %v866 = vadd.f32 %v746, %v781
  %v867 = vadd.f32 %v747, %v786
  %v868 = vadd.f32 %v748, %v791
  %v869 = vadd.f32 %v749, %v796
  %v870 = vadd.f32 %v750, %v801
  %v871 = vadd.f32 %v751, %v806
  %v872 = vadd.f32 %v752, %v811
  %v873 = vadd.f32 %v753, %v816
  %v874 = vadd.f32 %v754, %v821
  %v875 = vadd.f32 %v755, %v826
  %v876 = vadd.f32 %v756, %v831
  %v877 = vadd.f32 %v757, %v836
  %v878 = vadd.f32 %v758, %v841
  %v879 = vadd.f32 %v759, %v846
  %v880 = vadd.f32 %v760, %v851
  %v881 = vadd.f32 %v761, %v856
  %v882 = vadd.f32 %v762, %v861
  %v883 = vld [vmem:[%s2] sm:$0xff]
  %v884 = vld [vmem:[%s2 + $0x8] sm:$0xff]
  %v885 = vld [vmem:[%s2 + $0x10] sm:$0xff]
  %v886 = vld [vmem:[%s2 + $0x18] sm:$0xff]
  %v887 = vld [vmem:[%s2 + $0x20] sm:$0xff]
  %v888 = vld [vmem:[%s2 + $0x28] sm:$0xff]
  %v889 = vld [vmem:[%s2 + $0x30] sm:$0xff]
  %v890 = vld [vmem:[%s2 + $0x38] sm:$0xff]
  %v891 = vld [vmem:[%s2 + $0x40] sm:$0xff]
  %v892 = vld [vmem:[%s2 + $0x48] sm:$0xff]
  %v893 = vld [vmem:[%s2 + $0x50] sm:$0xff]
  %v894 = vld [vmem:[%s2 + $0x58] sm:$0xff]
  %v895 = vld [vmem:[%s2 + $0x60] sm:$0xff]
  %v896 = vld [vmem:[%s2 + $0x68] sm:$0xff]
  %v897 = vld [vmem:[%s2 + $0x70] sm:$0xff]
  %v898 = vld [vmem:[%s2 + $0x78] sm:$0xff]
  %v899 = vld [vmem:[%s2 + $0x80] sm:$0xff]
  %v900 = vld [vmem:[%s2 + $0x88] sm:$0xff]
  %v901 = vld [vmem:[%s2 + $0x90] sm:$0xff]
  %v902 = vld [vmem:[%s2 + $0x98] sm:$0xff]
  %v903 = vld [vmem:[%s2 + $0xa0] sm:$0xff]
  %v904 = vld [vmem:[%s2 + $0xa8] sm:$0xff]
  %v905 = vld [vmem:[%s2 + $0xb0] sm:$0xff]
  %v906 = vld [vmem:[%s2 + $0xb8] sm:$0xff]
  %v907 = vld [vmem:[%s2 + $0xc0] sm:$0xff]
  %v908 = vld [vmem:[%s2 + $0xc8] sm:$0xff]
  %v909 = vld [vmem:[%s2 + $0xd0] sm:$0xff]
  %v910 = vld [vmem:[%s2 + $0xd8] sm:$0xff]
  %v911 = vld [vmem:[%s2 + $0xe0] sm:$0xff]
  %v912 = vld [vmem:[%s2 + $0xe8] sm:$0xff]
  %v913 = vld [vmem:[%s2 + $0xf0] sm:$0xff]
  %v914 = vld [vmem:[%s2 + $0xf8] sm:$0xff]
  %v915 = vld [vmem:[%s2 + $0x100] sm:$0xff]
  %v916 = vld [vmem:[%s2 + $0x108] sm:$0xff]
  %v917 = vld [vmem:[%s2 + $0x110] sm:$0xff]
  %v918 = vld [vmem:[%s2 + $0x118] sm:$0xff]
  %v919 = vld [vmem:[%s2 + $0x120] sm:$0xff]
  %v920 = vld [vmem:[%s2 + $0x128] sm:$0xff]
  %v921 = vld [vmem:[%s2 + $0x130] sm:$0xff]
  %v922 = vld [vmem:[%s2 + $0x138] sm:$0xff]
  %vm923 = vcmask 261120
  %v925 = vsel %vm923, %v884, 0
  %v928 = vsel %vm923, %v886, 0
  %v931 = vsel %vm923, %v888, 0
  %v934 = vsel %vm923, %v890, 0
  %v937 = vsel %vm923, %v892, 0
  %v940 = vsel %vm923, %v894, 0
  %v943 = vsel %vm923, %v896, 0
  %v946 = vsel %vm923, %v898, 0
  %v949 = vsel %vm923, %v900, 0
  %v952 = vsel %vm923, %v902, 0
  %v955 = vsel %vm923, %v904, 0
  %v958 = vsel %vm923, %v906, 0
  %v961 = vsel %vm923, %v908, 0
  %v964 = vsel %vm923, %v910, 0
  %v967 = vsel %vm923, %v912, 0
  %v970 = vsel %vm923, %v914, 0
  %v973 = vsel %vm923, %v916, 0
  %v976 = vsel %vm923, %v918, 0
  %v979 = vsel %vm923, %v920, 0
  %v982 = vsel %vm923, %v922, 0
  %984 = vmatprep.subr.mxu0 0.0
  %985 = vmatpush1.msra.mxu0 %v863
  %986 = vmatprep.subr.mxu0 0.0
  %987 = vmatpush1.msra.mxu0 %v864
  %988 = vmatprep.subr.mxu0 0.0
  %989 = vmatpush1.msra.mxu0 %v865
  %990 = vmatprep.subr.mxu0 0.0
  %991 = vmatpush1.msra.mxu0 %v866
  %992 = vmatprep.subr.mxu0 0.0
  %993 = vmatpush1.msra.mxu0 %v867
  %994 = vmatprep.subr.mxu0 0.0
  %995 = vmatpush1.msra.mxu0 %v868
  %996 = vmatprep.subr.mxu0 0.0
  %997 = vmatpush1.msra.mxu0 %v869
  %998 = vmatprep.subr.mxu0 0.0
  %999 = vmatpush1.msra.mxu0 %v870
  %1000 = vmatprep.subr.mxu0 0.0
  %1001 = vmatpush1.msra.mxu0 %v871
  %1002 = vmatprep.subr.mxu0 0.0
  %1003 = vmatpush1.msra.mxu0 %v872
  %1004 = vmatprep.subr.mxu0 0.0
  %1005 = vmatpush1.msra.mxu0 %v873
  %1006 = vmatprep.subr.mxu0 0.0
  %1007 = vmatpush1.msra.mxu0 %v874
  %1008 = vmatprep.subr.mxu0 0.0
  %1009 = vmatpush1.msra.mxu0 %v875
  %1010 = vmatprep.subr.mxu0 0.0
  %1011 = vmatpush1.msra.mxu0 %v876
  %1012 = vmatprep.subr.mxu0 0.0
  %1013 = vmatpush1.msra.mxu0 %v877
  %1014 = vmatprep.subr.mxu0 0.0
  %1015 = vmatpush1.msra.mxu0 %v878
  %1016 = vmatprep.subr.mxu0 0.0
  %1017 = vmatpush1.msra.mxu0 %v879
  %1018 = vmatprep.subr.mxu0 0.0
  %1019 = vmatpush1.msra.mxu0 %v880
  %1020 = vmatprep.subr.mxu0 0.0
  %1021 = vmatpush1.msra.mxu0 %v881
  %1022 = vmatprep.subr.mxu0 0.0
  %1023 = vmatpush1.msra.mxu0 %v882
  %1024 = vmatprep.subr.mxu0 0.0
  %1025 = vmatpush1.msra.mxu0 0.0
  %1026 = vmatprep.subr.mxu0 0.0
  %1027 = vmatpush1.msra.mxu0 0.0
  %1028 = vmatprep.subr.mxu0 0.0
  %1029 = vmatpush1.msra.mxu0 0.0
  %1030 = vmatprep.subr.mxu0 0.0
  %1031 = vmatpush1.msra.mxu0 0.0
  %1032 = vmatprep.subr.mxu0 0.0
  %1033 = vmatpush1.msra.mxu0 0.0
  %1034 = vmatprep.subr.mxu0 0.0
  %1035 = vmatpush1.msra.mxu0 0.0
  %1036 = vmatprep.subr.mxu0 0.0
  %1037 = vmatpush1.msra.mxu0 0.0
  %1038 = vmatprep.subr.mxu0 0.0
  %1039 = vmatpush1.msra.mxu0 0.0
  %1040 = vmatprep.subr.mxu0 0.0
  %1041 = vmatpush1.msra.mxu0 0.0
  %1042 = vmatprep.subr.mxu0 0.0
  %1043 = vmatpush1.msra.mxu0 0.0
  %1044 = vmatprep.subr.mxu0 0.0
  %1045 = vmatpush1.msra.mxu0 0.0
  %1046 = vmatprep.subr.mxu0 0.0
  %1047 = vmatpush1.msra.mxu0 0.0
  %1048 = vmatprep.mubr.f32.mxu0 %v925
  %1049 = vmatmul.mubr.f32.gmra.mrb[0].mxu0 %v883
  %v1050 = vpop.f32.mrb[0].mxu0
  %v1051 = vadd.f32 0.0, %v1050
  %v1052 = vpop.f32.mrb[0].mxu0
  %1053 = vmatprep.mubr.f32.mxu0 %v928
  %1054 = vmatmul.mubr.f32.gmra.mrb[0].mxu0 %v885
  %v1055 = vpop.f32.mrb[0].mxu0
  %v1056 = vadd.f32 0.0, %v1055
  %v1057 = vpop.f32.mrb[0].mxu0
  %1058 = vmatprep.mubr.f32.mxu0 %v931
  %1059 = vmatmul.mubr.f32.gmra.mrb[0].mxu0 %v887
  %v1060 = vpop.f32.mrb[0].mxu0
  %v1061 = vadd.f32 0.0, %v1060
  %v1062 = vpop.f32.mrb[0].mxu0
  %1063 = vmatprep.mubr.f32.mxu0 %v934
  %1064 = vmatmul.mubr.f32.gmra.mrb[0].mxu0 %v889
  %v1065 = vpop.f32.mrb[0].mxu0
  %v1066 = vadd.f32 0.0, %v1065
  %v1067 = vpop.f32.mrb[0].mxu0
  %1068 = vmatprep.mubr.f32.mxu0 %v937
  %1069 = vmatmul.mubr.f32.gmra.mrb[0].mxu0 %v891
  %v1070 = vpop.f32.mrb[0].mxu0
  %v1071 = vadd.f32 0.0, %v1070
  %v1072 = vpop.f32.mrb[0].mxu0
  %1073 = vmatprep.mubr.f32.mxu0 %v940
  %1074 = vmatmul.mubr.f32.gmra.mrb[0].mxu0 %v893
  %v1075 = vpop.f32.mrb[0].mxu0
  %v1076 = vadd.f32 0.0, %v1075
  %v1077 = vpop.f32.mrb[0].mxu0
  %1078 = vmatprep.mubr.f32.mxu0 %v943
  %1079 = vmatmul.mubr.f32.gmra.mrb[0].mxu0 %v895
  %v1080 = vpop.f32.mrb[0].mxu0
  %v1081 = vadd.f32 0.0, %v1080
  %v1082 = vpop.f32.mrb[0].mxu0
  %1083 = vmatprep.mubr.f32.mxu0 %v946
  %1084 = vmatmul.mubr.f32.gmra.mrb[0].mxu0 %v897
  %v1085 = vpop.f32.mrb[0].mxu0
  %v1086 = vadd.f32 0.0, %v1085
  %v1087 = vpop.f32.mrb[0].mxu0
  %1088 = vmatprep.mubr.f32.mxu0 %v949
  %1089 = vmatmul.mubr.f32.gmra.mrb[0].mxu0 %v899
  %v1090 = vpop.f32.mrb[0].mxu0
  %v1091 = vadd.f32 0.0, %v1090
  %v1092 = vpop.f32.mrb[0].mxu0
  %1093 = vmatprep.mubr.f32.mxu0 %v952
  %1094 = vmatmul.mubr.f32.gmra.mrb[0].mxu0 %v901
  %v1095 = vpop.f32.mrb[0].mxu0
  %v1096 = vadd.f32 0.0, %v1095
  %v1097 = vpop.f32.mrb[0].mxu0
  %1098 = vmatprep.mubr.f32.mxu0 %v955
  %1099 = vmatmul.mubr.f32.gmra.mrb[0].mxu0 %v903
  %v1100 = vpop.f32.mrb[0].mxu0
  %v1101 = vadd.f32 0.0, %v1100
  %v1102 = vpop.f32.mrb[0].mxu0
  %1103 = vmatprep.mubr.f32.mxu0 %v958
  %1104 = vmatmul.mubr.f32.gmra.mrb[0].mxu0 %v905
  %v1105 = vpop.f32.mrb[0].mxu0
  %v1106 = vadd.f32 0.0, %v1105
  %v1107 = vpop.f32.mrb[0].mxu0
  %1108 = vmatprep.mubr.f32.mxu0 %v961
  %1109 = vmatmul.mubr.f32.gmra.mrb[0].mxu0 %v907
  %v1110 = vpop.f32.mrb[0].mxu0
  %v1111 = vadd.f32 0.0, %v1110
  %v1112 = vpop.f32.mrb[0].mxu0
  %1113 = vmatprep.mubr.f32.mxu0 %v964
  %1114 = vmatmul.mubr.f32.gmra.mrb[0].mxu0 %v909
  %v1115 = vpop.f32.mrb[0].mxu0
  %v1116 = vadd.f32 0.0, %v1115
  %v1117 = vpop.f32.mrb[0].mxu0
  %1118 = vmatprep.mubr.f32.mxu0 %v967
  %1119 = vmatmul.mubr.f32.gmra.mrb[0].mxu0 %v911
  %v1120 = vpop.f32.mrb[0].mxu0
  %v1121 = vadd.f32 0.0, %v1120
  %v1122 = vpop.f32.mrb[0].mxu0
  %1123 = vmatprep.mubr.f32.mxu0 %v970
  %1124 = vmatmul.mubr.f32.gmra.mrb[0].mxu0 %v913
  %v1125 = vpop.f32.mrb[0].mxu0
  %v1126 = vadd.f32 0.0, %v1125
  %v1127 = vpop.f32.mrb[0].mxu0
  %1128 = vmatprep.mubr.f32.mxu0 %v973
  %1129 = vmatmul.mubr.f32.gmra.mrb[0].mxu0 %v915
  %v1130 = vpop.f32.mrb[0].mxu0
  %v1131 = vadd.f32 0.0, %v1130
  %v1132 = vpop.f32.mrb[0].mxu0
  %1133 = vmatprep.mubr.f32.mxu0 %v976
  %1134 = vmatmul.mubr.f32.gmra.mrb[0].mxu0 %v917
  %v1135 = vpop.f32.mrb[0].mxu0
  %v1136 = vadd.f32 0.0, %v1135
  %v1137 = vpop.f32.mrb[0].mxu0
  %1138 = vmatprep.mubr.f32.mxu0 %v979
  %1139 = vmatmul.mubr.f32.gmra.mrb[0].mxu0 %v919
  %v1140 = vpop.f32.mrb[0].mxu0
  %v1141 = vadd.f32 0.0, %v1140
  %v1142 = vpop.f32.mrb[0].mxu0
  %1143 = vmatprep.mubr.f32.mxu0 %v982
  %1144 = vmatmul.mubr.f32.gmra.mrb[0].mxu0 %v921
  %v1145 = vpop.f32.mrb[0].mxu0
  %v1146 = vadd.f32 0.0, %v1145
  %v1147 = vpop.f32.mrb[0].mxu0
  %1148 = vdwg.mxu0
  %v1149 = vxor.u32 %v1051, 2147483648
  %v1150 = vxor.u32 %v1056, 2147483648
  %v1151 = vxor.u32 %v1061, 2147483648
  %v1152 = vxor.u32 %v1066, 2147483648
  %v1153 = vxor.u32 %v1071, 2147483648
  %v1154 = vxor.u32 %v1076, 2147483648
  %v1155 = vxor.u32 %v1081, 2147483648
  %v1156 = vxor.u32 %v1086, 2147483648
  %v1157 = vxor.u32 %v1091, 2147483648
  %v1158 = vxor.u32 %v1096, 2147483648
  %v1159 = vxor.u32 %v1101, 2147483648
  %v1160 = vxor.u32 %v1106, 2147483648
  %v1161 = vxor.u32 %v1111, 2147483648
  %v1162 = vxor.u32 %v1116, 2147483648
  %v1163 = vxor.u32 %v1121, 2147483648
  %v1164 = vxor.u32 %v1126, 2147483648
  %v1165 = vxor.u32 %v1131, 2147483648
  %v1166 = vxor.u32 %v1136, 2147483648
  %v1167 = vxor.u32 %v1141, 2147483648
  %v1168 = vxor.u32 %v1146, 2147483648
  %v1169 = vmul.f32 %v1149, 1.442695
  %v1170 = vpow.pop %v1169
  %v1171 = vmul.f32 %v1150, 1.442695
  %v1172 = vpow.pop %v1171
  %v1173 = vmul.f32 %v1151, 1.442695
  %v1174 = vpow.pop %v1173
  %v1175 = vmul.f32 %v1152, 1.442695
  %v1176 = vpow.pop %v1175
  %v1177 = vmul.f32 %v1153, 1.442695
  %v1178 = vpow.pop %v1177
  %v1179 = vmul.f32 %v1154, 1.442695
  %v1180 = vpow.pop %v1179
  %v1181 = vmul.f32 %v1155, 1.442695
  %v1182 = vpow.pop %v1181
  %v1183 = vmul.f32 %v1156, 1.442695
  %v1184 = vpow.pop %v1183
  %v1185 = vmul.f32 %v1157, 1.442695
  %v1186 = vpow.pop %v1185
  %v1187 = vmul.f32 %v1158, 1.442695
  %v1188 = vpow.pop %v1187
  %v1189 = vmul.f32 %v1159, 1.442695
  %v1190 = vpow.pop %v1189
  %v1191 = vmul.f32 %v1160, 1.442695
  %v1192 = vpow.pop %v1191
  %v1193 = vmul.f32 %v1161, 1.442695
  %v1194 = vpow.pop %v1193
  %v1195 = vmul.f32 %v1162, 1.442695
  %v1196 = vpow.pop %v1195
  %v1197 = vmul.f32 %v1163, 1.442695
  %v1198 = vpow.pop %v1197
  %v1199 = vmul.f32 %v1164, 1.442695
  %v1200 = vpow.pop %v1199
  %v1201 = vmul.f32 %v1165, 1.442695
  %v1202 = vpow.pop %v1201
  %v1203 = vmul.f32 %v1166, 1.442695
  %v1204 = vpow.pop %v1203
  %v1205 = vmul.f32 %v1167, 1.442695
  %v1206 = vpow.pop %v1205
  %v1207 = vmul.f32 %v1168, 1.442695
  %v1208 = vpow.pop %v1207
  %v1209 = vadd.f32 %v1170, 1.0
  %v1210 = vadd.f32 %v1172, 1.0
  %v1211 = vadd.f32 %v1174, 1.0
  %v1212 = vadd.f32 %v1176, 1.0
  %v1213 = vadd.f32 %v1178, 1.0
  %v1214 = vadd.f32 %v1180, 1.0
  %v1215 = vadd.f32 %v1182, 1.0
  %v1216 = vadd.f32 %v1184, 1.0
  %v1217 = vadd.f32 %v1186, 1.0
  %v1218 = vadd.f32 %v1188, 1.0
  %v1219 = vadd.f32 %v1190, 1.0
  %v1220 = vadd.f32 %v1192, 1.0
  %v1221 = vadd.f32 %v1194, 1.0
  %v1222 = vadd.f32 %v1196, 1.0
  %v1223 = vadd.f32 %v1198, 1.0
  %v1224 = vadd.f32 %v1200, 1.0
  %v1225 = vadd.f32 %v1202, 1.0
  %v1226 = vadd.f32 %v1204, 1.0
  %v1227 = vadd.f32 %v1206, 1.0
  %v1228 = vadd.f32 %v1208, 1.0
  %v1229 = vrcp.pop %v1209
  %v1230 = vmul.f32 1.0, %v1229
  %v1231 = vrcp.pop %v1210
  %v1232 = vmul.f32 1.0, %v1231
  %v1233 = vrcp.pop %v1211
  %v1234 = vmul.f32 1.0, %v1233
  %v1235 = vrcp.pop %v1212
  %v1236 = vmul.f32 1.0, %v1235
  %v1237 = vrcp.pop %v1213
  %v1238 = vmul.f32 1.0, %v1237
  %v1239 = vrcp.pop %v1214
  %v1240 = vmul.f32 1.0, %v1239
  %v1241 = vrcp.pop %v1215
  %v1242 = vmul.f32 1.0, %v1241
  %v1243 = vrcp.pop %v1216
  %v1244 = vmul.f32 1.0, %v1243
  %v1245 = vrcp.pop %v1217
  %v1246 = vmul.f32 1.0, %v1245
  %v1247 = vrcp.pop %v1218
  %v1248 = vmul.f32 1.0, %v1247
  %v1249 = vrcp.pop %v1219
  %v1250 = vmul.f32 1.0, %v1249
  %v1251 = vrcp.pop %v1220
  %v1252 = vmul.f32 1.0, %v1251
  %v1253 = vrcp.pop %v1221
  %v1254 = vmul.f32 1.0, %v1253
  %v1255 = vrcp.pop %v1222
  %v1256 = vmul.f32 1.0, %v1255
  %v1257 = vrcp.pop %v1223
  %v1258 = vmul.f32 1.0, %v1257
  %v1259 = vrcp.pop %v1224
  %v1260 = vmul.f32 1.0, %v1259
  %v1261 = vrcp.pop %v1225
  %v1262 = vmul.f32 1.0, %v1261
  %v1263 = vrcp.pop %v1226
  %v1264 = vmul.f32 1.0, %v1263
  %v1265 = vrcp.pop %v1227
  %v1266 = vmul.f32 1.0, %v1265
  %v1267 = vrcp.pop %v1228
  %v1268 = vmul.f32 1.0, %v1267
  %v1269 = vmul.f32 %v1051, %v1230
  %v1270 = vmul.f32 %v1056, %v1232
  %v1271 = vmul.f32 %v1061, %v1234
  %v1272 = vmul.f32 %v1066, %v1236
  %v1273 = vmul.f32 %v1071, %v1238
  %v1274 = vmul.f32 %v1076, %v1240
  %v1275 = vmul.f32 %v1081, %v1242
  %v1276 = vmul.f32 %v1086, %v1244
  %v1277 = vmul.f32 %v1091, %v1246
  %v1278 = vmul.f32 %v1096, %v1248
  %v1279 = vmul.f32 %v1101, %v1250
  %v1280 = vmul.f32 %v1106, %v1252
  %v1281 = vmul.f32 %v1111, %v1254
  %v1282 = vmul.f32 %v1116, %v1256
  %v1283 = vmul.f32 %v1121, %v1258
  %v1284 = vmul.f32 %v1126, %v1260
  %v1285 = vmul.f32 %v1131, %v1262
  %v1286 = vmul.f32 %v1136, %v1264
  %v1287 = vmul.f32 %v1141, %v1266
  %v1288 = vmul.f32 %v1146, %v1268
  %v1289 = vld [vmem:[%s3] sm:$0xff]
  %v1290 = vld [vmem:[%s3 + $0x8] sm:$0xff]
  %v1291 = vld [vmem:[%s3 + $0x10] sm:$0xff]
  %v1292 = vld [vmem:[%s3 + $0x18] sm:$0xff]
  %v1293 = vld [vmem:[%s3 + $0x20] sm:$0xff]
  %v1294 = vld [vmem:[%s3 + $0x28] sm:$0xff]
  %v1295 = vld [vmem:[%s3 + $0x30] sm:$0xff]
  %v1296 = vld [vmem:[%s3 + $0x38] sm:$0xff]
  %v1297 = vld [vmem:[%s3 + $0x40] sm:$0xff]
  %v1298 = vld [vmem:[%s3 + $0x48] sm:$0xff]
  %v1299 = vld [vmem:[%s3 + $0x50] sm:$0xff]
  %v1300 = vld [vmem:[%s3 + $0x58] sm:$0xff]
  %v1301 = vld [vmem:[%s3 + $0x60] sm:$0xff]
  %v1302 = vld [vmem:[%s3 + $0x68] sm:$0xff]
  %v1303 = vld [vmem:[%s3 + $0x70] sm:$0xff]
  %v1304 = vld [vmem:[%s3 + $0x78] sm:$0xff]
  %v1305 = vld [vmem:[%s3 + $0x80] sm:$0xff]
  %v1306 = vld [vmem:[%s3 + $0x88] sm:$0xff]
  %v1307 = vld [vmem:[%s3 + $0x90] sm:$0xff]
  %v1308 = vld [vmem:[%s3 + $0x98] sm:$0xff]
  %v1309 = vld [vmem:[%s3 + $0xa0] sm:$0xff]
  %v1310 = vld [vmem:[%s3 + $0xa8] sm:$0xff]
  %v1311 = vld [vmem:[%s3 + $0xb0] sm:$0xff]
  %v1312 = vld [vmem:[%s3 + $0xb8] sm:$0xff]
  %v1313 = vld [vmem:[%s3 + $0xc0] sm:$0xff]
  %v1314 = vld [vmem:[%s3 + $0xc8] sm:$0xff]
  %v1315 = vld [vmem:[%s3 + $0xd0] sm:$0xff]
  %v1316 = vld [vmem:[%s3 + $0xd8] sm:$0xff]
  %v1317 = vld [vmem:[%s3 + $0xe0] sm:$0xff]
  %v1318 = vld [vmem:[%s3 + $0xe8] sm:$0xff]
  %v1319 = vld [vmem:[%s3 + $0xf0] sm:$0xff]
  %v1320 = vld [vmem:[%s3 + $0xf8] sm:$0xff]
  %v1321 = vld [vmem:[%s3 + $0x100] sm:$0xff]
  %v1322 = vld [vmem:[%s3 + $0x108] sm:$0xff]
  %v1323 = vld [vmem:[%s3 + $0x110] sm:$0xff]
  %v1324 = vld [vmem:[%s3 + $0x118] sm:$0xff]
  %v1325 = vld [vmem:[%s3 + $0x120] sm:$0xff]
  %v1326 = vld [vmem:[%s3 + $0x128] sm:$0xff]
  %v1327 = vld [vmem:[%s3 + $0x130] sm:$0xff]
  %v1328 = vld [vmem:[%s3 + $0x138] sm:$0xff]
  %v1330 = vsel %vm923, %v1290, 0
  %v1333 = vsel %vm923, %v1292, 0
  %v1336 = vsel %vm923, %v1294, 0
  %v1339 = vsel %vm923, %v1296, 0
  %v1342 = vsel %vm923, %v1298, 0
  %v1345 = vsel %vm923, %v1300, 0
  %v1348 = vsel %vm923, %v1302, 0
  %v1351 = vsel %vm923, %v1304, 0
  %v1354 = vsel %vm923, %v1306, 0
  %v1357 = vsel %vm923, %v1308, 0
  %v1360 = vsel %vm923, %v1310, 0
  %v1363 = vsel %vm923, %v1312, 0
  %v1366 = vsel %vm923, %v1314, 0
  %v1369 = vsel %vm923, %v1316, 0
  %v1372 = vsel %vm923, %v1318, 0
  %v1375 = vsel %vm923, %v1320, 0
  %v1378 = vsel %vm923, %v1322, 0
  %v1381 = vsel %vm923, %v1324, 0
  %v1384 = vsel %vm923, %v1326, 0
  %v1387 = vsel %vm923, %v1328, 0
  %1389 = vmatprep.subr.mxu0 0.0
  %1390 = vmatpush1.msra.mxu0 %v1269
  %1391 = vmatprep.subr.mxu0 0.0
  %1392 = vmatpush1.msra.mxu0 %v1270
  %1393 = vmatprep.subr.mxu0 0.0
  %1394 = vmatpush1.msra.mxu0 %v1271
  %1395 = vmatprep.subr.mxu0 0.0
  %1396 = vmatpush1.msra.mxu0 %v1272
  %1397 = vmatprep.subr.mxu0 0.0
  %1398 = vmatpush1.msra.mxu0 %v1273
  %1399 = vmatprep.subr.mxu0 0.0
  %1400 = vmatpush1.msra.mxu0 %v1274
  %1401 = vmatprep.subr.mxu0 0.0
  %1402 = vmatpush1.msra.mxu0 %v1275
  %1403 = vmatprep.subr.mxu0 0.0
  %1404 = vmatpush1.msra.mxu0 %v1276
  %1405 = vmatprep.subr.mxu0 0.0
  %1406 = vmatpush1.msra.mxu0 %v1277
  %1407 = vmatprep.subr.mxu0 0.0
  %1408 = vmatpush1.msra.mxu0 %v1278
  %1409 = vmatprep.subr.mxu0 0.0
  %1410 = vmatpush1.msra.mxu0 %v1279
  %1411 = vmatprep.subr.mxu0 0.0
  %1412 = vmatpush1.msra.mxu0 %v1280
  %1413 = vmatprep.subr.mxu0 0.0
  %1414 = vmatpush1.msra.mxu0 %v1281
  %1415 = vmatprep.subr.mxu0 0.0
  %1416 = vmatpush1.msra.mxu0 %v1282
  %1417 = vmatprep.subr.mxu0 0.0
  %1418 = vmatpush1.msra.mxu0 %v1283
  %1419 = vmatprep.subr.mxu0 0.0
  %1420 = vmatpush1.msra.mxu0 %v1284
  %1421 = vmatprep.subr.mxu0 0.0
  %1422 = vmatpush1.msra.mxu0 %v1285
  %1423 = vmatprep.subr.mxu0 0.0
  %1424 = vmatpush1.msra.mxu0 %v1286
  %1425 = vmatprep.subr.mxu0 0.0
  %1426 = vmatpush1.msra.mxu0 %v1287
  %1427 = vmatprep.subr.mxu0 0.0
  %1428 = vmatpush1.msra.mxu0 %v1288
  %1429 = vmatprep.subr.mxu0 0.0
  %1430 = vmatpush1.msra.mxu0 0.0
  %1431 = vmatprep.subr.mxu0 0.0
  %1432 = vmatpush1.msra.mxu0 0.0
  %1433 = vmatprep.subr.mxu0 0.0
  %1434 = vmatpush1.msra.mxu0 0.0
  %1435 = vmatprep.subr.mxu0 0.0
  %1436 = vmatpush1.msra.mxu0 0.0
  %1437 = vmatprep.subr.mxu0 0.0
  %1438 = vmatpush1.msra.mxu0 0.0
  %1439 = vmatprep.subr.mxu0 0.0
  %1440 = vmatpush1.msra.mxu0 0.0
  %1441 = vmatprep.subr.mxu0 0.0
  %1442 = vmatpush1.msra.mxu0 0.0
  %1443 = vmatprep.subr.mxu0 0.0
  %1444 = vmatpush1.msra.mxu0 0.0
  %1445 = vmatprep.subr.mxu0 0.0
  %1446 = vmatpush1.msra.mxu0 0.0
  %1447 = vmatprep.subr.mxu0 0.0
  %1448 = vmatpush1.msra.mxu0 0.0
  %1449 = vmatprep.subr.mxu0 0.0
  %1450 = vmatpush1.msra.mxu0 0.0
  %1451 = vmatprep.subr.mxu0 0.0
  %1452 = vmatpush1.msra.mxu0 0.0
  %1453 = vmatprep.mubr.f32.mxu0 %v1330
  %1454 = vmatmul.mubr.f32.gmra.mrb[0].mxu0 %v1289
  %v1455 = vpop.f32.mrb[0].mxu0
  %v1456 = vadd.f32 0.0, %v1455
  %v1457 = vpop.f32.mrb[0].mxu0
  %1458 = vmatprep.mubr.f32.mxu0 %v1333
  %1459 = vmatmul.mubr.f32.gmra.mrb[0].mxu0 %v1291
  %v1460 = vpop.f32.mrb[0].mxu0
  %v1461 = vadd.f32 0.0, %v1460
  %v1462 = vpop.f32.mrb[0].mxu0
  %1463 = vmatprep.mubr.f32.mxu0 %v1336
  %1464 = vmatmul.mubr.f32.gmra.mrb[0].mxu0 %v1293
  %v1465 = vpop.f32.mrb[0].mxu0
  %v1466 = vadd.f32 0.0, %v1465
  %v1467 = vpop.f32.mrb[0].mxu0
  %1468 = vmatprep.mubr.f32.mxu0 %v1339
  %1469 = vmatmul.mubr.f32.gmra.mrb[0].mxu0 %v1295
  %v1470 = vpop.f32.mrb[0].mxu0
  %v1471 = vadd.f32 0.0, %v1470
  %v1472 = vpop.f32.mrb[0].mxu0
  %1473 = vmatprep.mubr.f32.mxu0 %v1342
  %1474 = vmatmul.mubr.f32.gmra.mrb[0].mxu0 %v1297
  %v1475 = vpop.f32.mrb[0].mxu0
  %v1476 = vadd.f32 0.0, %v1475
  %v1477 = vpop.f32.mrb[0].mxu0
  %1478 = vmatprep.mubr.f32.mxu0 %v1345
  %1479 = vmatmul.mubr.f32.gmra.mrb[0].mxu0 %v1299
  %v1480 = vpop.f32.mrb[0].mxu0
  %v1481 = vadd.f32 0.0, %v1480
  %v1482 = vpop.f32.mrb[0].mxu0
  %1483 = vmatprep.mubr.f32.mxu0 %v1348
  %1484 = vmatmul.mubr.f32.gmra.mrb[0].mxu0 %v1301
  %v1485 = vpop.f32.mrb[0].mxu0
  %v1486 = vadd.f32 0.0, %v1485
  %v1487 = vpop.f32.mrb[0].mxu0
  %1488 = vmatprep.mubr.f32.mxu0 %v1351
  %1489 = vmatmul.mubr.f32.gmra.mrb[0].mxu0 %v1303
  %v1490 = vpop.f32.mrb[0].mxu0
  %v1491 = vadd.f32 0.0, %v1490
  %v1492 = vpop.f32.mrb[0].mxu0
  %1493 = vmatprep.mubr.f32.mxu0 %v1354
  %1494 = vmatmul.mubr.f32.gmra.mrb[0].mxu0 %v1305
  %v1495 = vpop.f32.mrb[0].mxu0
  %v1496 = vadd.f32 0.0, %v1495
  %v1497 = vpop.f32.mrb[0].mxu0
  %1498 = vmatprep.mubr.f32.mxu0 %v1357
  %1499 = vmatmul.mubr.f32.gmra.mrb[0].mxu0 %v1307
  %v1500 = vpop.f32.mrb[0].mxu0
  %v1501 = vadd.f32 0.0, %v1500
  %v1502 = vpop.f32.mrb[0].mxu0
  %1503 = vmatprep.mubr.f32.mxu0 %v1360
  %1504 = vmatmul.mubr.f32.gmra.mrb[0].mxu0 %v1309
  %v1505 = vpop.f32.mrb[0].mxu0
  %v1506 = vadd.f32 0.0, %v1505
  %v1507 = vpop.f32.mrb[0].mxu0
  %1508 = vmatprep.mubr.f32.mxu0 %v1363
  %1509 = vmatmul.mubr.f32.gmra.mrb[0].mxu0 %v1311
  %v1510 = vpop.f32.mrb[0].mxu0
  %v1511 = vadd.f32 0.0, %v1510
  %v1512 = vpop.f32.mrb[0].mxu0
  %1513 = vmatprep.mubr.f32.mxu0 %v1366
  %1514 = vmatmul.mubr.f32.gmra.mrb[0].mxu0 %v1313
  %v1515 = vpop.f32.mrb[0].mxu0
  %v1516 = vadd.f32 0.0, %v1515
  %v1517 = vpop.f32.mrb[0].mxu0
  %1518 = vmatprep.mubr.f32.mxu0 %v1369
  %1519 = vmatmul.mubr.f32.gmra.mrb[0].mxu0 %v1315
  %v1520 = vpop.f32.mrb[0].mxu0
  %v1521 = vadd.f32 0.0, %v1520
  %v1522 = vpop.f32.mrb[0].mxu0
  %1523 = vmatprep.mubr.f32.mxu0 %v1372
  %1524 = vmatmul.mubr.f32.gmra.mrb[0].mxu0 %v1317
  %v1525 = vpop.f32.mrb[0].mxu0
  %v1526 = vadd.f32 0.0, %v1525
  %v1527 = vpop.f32.mrb[0].mxu0
  %1528 = vmatprep.mubr.f32.mxu0 %v1375
  %1529 = vmatmul.mubr.f32.gmra.mrb[0].mxu0 %v1319
  %v1530 = vpop.f32.mrb[0].mxu0
  %v1531 = vadd.f32 0.0, %v1530
  %v1532 = vpop.f32.mrb[0].mxu0
  %1533 = vmatprep.mubr.f32.mxu0 %v1378
  %1534 = vmatmul.mubr.f32.gmra.mrb[0].mxu0 %v1321
  %v1535 = vpop.f32.mrb[0].mxu0
  %v1536 = vadd.f32 0.0, %v1535
  %v1537 = vpop.f32.mrb[0].mxu0
  %1538 = vmatprep.mubr.f32.mxu0 %v1381
  %1539 = vmatmul.mubr.f32.gmra.mrb[0].mxu0 %v1323
  %v1540 = vpop.f32.mrb[0].mxu0
  %v1541 = vadd.f32 0.0, %v1540
  %v1542 = vpop.f32.mrb[0].mxu0
  %1543 = vmatprep.mubr.f32.mxu0 %v1384
  %1544 = vmatmul.mubr.f32.gmra.mrb[0].mxu0 %v1325
  %v1545 = vpop.f32.mrb[0].mxu0
  %v1546 = vadd.f32 0.0, %v1545
  %v1547 = vpop.f32.mrb[0].mxu0
  %1548 = vmatprep.mubr.f32.mxu0 %v1387
  %1549 = vmatmul.mubr.f32.gmra.mrb[0].mxu0 %v1327
  %v1550 = vpop.f32.mrb[0].mxu0
  %v1551 = vadd.f32 0.0, %v1550
  %v1552 = vpop.f32.mrb[0].mxu0
  %1553 = vdwg.mxu0
  %v1554 = vadd.f32 %v412, %v1456
  %v1555 = vadd.f32 %v413, %v1461
  %v1556 = vadd.f32 %v414, %v1466
  %v1557 = vadd.f32 %v415, %v1471
  %v1558 = vadd.f32 %v416, %v1476
  %v1559 = vadd.f32 %v417, %v1481
  %v1560 = vadd.f32 %v418, %v1486
  %v1561 = vadd.f32 %v419, %v1491
  %v1562 = vadd.f32 %v420, %v1496
  %v1563 = vadd.f32 %v421, %v1501
  %v1564 = vadd.f32 %v422, %v1506
  %v1565 = vadd.f32 %v423, %v1511
  %v1566 = vadd.f32 %v424, %v1516
  %v1567 = vadd.f32 %v425, %v1521
  %v1568 = vadd.f32 %v426, %v1526
  %v1569 = vadd.f32 %v427, %v1531
  %v1570 = vadd.f32 %v428, %v1536
  %v1571 = vadd.f32 %v429, %v1541
  %v1572 = vadd.f32 %v430, %v1546
  %v1573 = vadd.f32 %v431, %v1551
  %v1574 = vld [vmem:[%s6] sm:$0xff]
  %v1575 = vld [vmem:[%s6 + $0x8] sm:$0xff]
  %v1576 = vld [vmem:[%s6 + $0x10] sm:$0xff]
  %v1577 = vld [vmem:[%s6 + $0x18] sm:$0xff]
  %v1578 = vld [vmem:[%s6 + $0x20] sm:$0xff]
  %v1579 = vld [vmem:[%s6 + $0x28] sm:$0xff]
  %v1580 = vld [vmem:[%s6 + $0x30] sm:$0xff]
  %v1581 = vld [vmem:[%s6 + $0x38] sm:$0xff]
  %v1582 = vld [vmem:[%s6 + $0x40] sm:$0xff]
  %v1583 = vld [vmem:[%s6 + $0x48] sm:$0xff]
  %v1584 = vld [vmem:[%s6 + $0x50] sm:$0xff]
  %v1585 = vld [vmem:[%s6 + $0x58] sm:$0xff]
  %v1586 = vld [vmem:[%s6 + $0x60] sm:$0xff]
  %v1587 = vld [vmem:[%s6 + $0x68] sm:$0xff]
  %v1588 = vld [vmem:[%s6 + $0x70] sm:$0xff]
  %v1589 = vld [vmem:[%s6 + $0x78] sm:$0xff]
  %v1590 = vld [vmem:[%s6 + $0x80] sm:$0xff]
  %v1591 = vld [vmem:[%s6 + $0x88] sm:$0xff]
  %v1592 = vld [vmem:[%s6 + $0x90] sm:$0xff]
  %v1593 = vld [vmem:[%s6 + $0x98] sm:$0xff]
  %v1594 = vld [vmem:[%s7] sm:$0xff]
  %v1595 = vld [vmem:[%s7 + $0x8] sm:$0xff]
  %v1596 = vld [vmem:[%s7 + $0x10] sm:$0xff]
  %v1597 = vld [vmem:[%s7 + $0x18] sm:$0xff]
  %v1598 = vld [vmem:[%s7 + $0x20] sm:$0xff]
  %v1599 = vld [vmem:[%s7 + $0x28] sm:$0xff]
  %v1600 = vld [vmem:[%s7 + $0x30] sm:$0xff]
  %v1601 = vld [vmem:[%s7 + $0x38] sm:$0xff]
  %v1602 = vld [vmem:[%s7 + $0x40] sm:$0xff]
  %v1603 = vld [vmem:[%s7 + $0x48] sm:$0xff]
  %v1604 = vld [vmem:[%s7 + $0x50] sm:$0xff]
  %v1605 = vld [vmem:[%s7 + $0x58] sm:$0xff]
  %v1606 = vld [vmem:[%s7 + $0x60] sm:$0xff]
  %v1607 = vld [vmem:[%s7 + $0x68] sm:$0xff]
  %v1608 = vld [vmem:[%s7 + $0x70] sm:$0xff]
  %v1609 = vld [vmem:[%s7 + $0x78] sm:$0xff]
  %v1610 = vld [vmem:[%s7 + $0x80] sm:$0xff]
  %v1611 = vld [vmem:[%s7 + $0x88] sm:$0xff]
  %v1612 = vld [vmem:[%s7 + $0x90] sm:$0xff]
  %v1613 = vld [vmem:[%s7 + $0x98] sm:$0xff]
  %v1614 = vadd.f32 %v1554, %v1555
  %v1615 = vadd.f32 %v1614, %v1556
  %v1616 = vadd.f32 %v1615, %v1557
  %v1617 = vrot.slane %v1616, 4
  %v1618 = vadd.f32 %v1616, %v1617
  %v1619 = vrot.slane %v1618, 2
  %v1620 = vadd.f32 %v1618, %v1619
  %v1621 = vrot.slane %v1620, 1
  %v1622 = vadd.f32 %v1620, %v1621
  %v1623 = vmul.f32 %v1622, %v481
  %v1624 = vsub.f32 %v1554, %v1623
  %v1625 = vsub.f32 %v1555, %v1623
  %v1626 = vsub.f32 %v1556, %v1623
  %v1627 = vsub.f32 %v1557, %v1623
  %v1628 = vmul.f32 %v1624, %v1624
  %v1629 = vmul.f32 %v1625, %v1625
  %v1630 = vmul.f32 %v1626, %v1626
  %v1631 = vmul.f32 %v1627, %v1627
  %v1632 = vadd.f32 %v1628, %v1629
  %v1633 = vadd.f32 %v1632, %v1630
  %v1634 = vadd.f32 %v1633, %v1631
  %v1635 = vrot.slane %v1634, 4
  %v1636 = vadd.f32 %v1634, %v1635
  %v1637 = vrot.slane %v1636, 2
  %v1638 = vadd.f32 %v1636, %v1637
  %v1639 = vrot.slane %v1638, 1
  %v1640 = vadd.f32 %v1638, %v1639
  %v1641 = vmul.f32 %v1640, %v481
  %v1642 = vadd.f32 %v1641, 1e-05
  %v1643 = vrsqrt.pop %v1642
  %v1644 = vmul.f32 %v1624, %v1643
  %v1645 = vmul.f32 %v1625, %v1643
  %v1646 = vmul.f32 %v1626, %v1643
  %v1647 = vmul.f32 %v1627, %v1643
  %v1648 = vadd.f32 %v1558, %v1559
  %v1649 = vadd.f32 %v1648, %v1560
  %v1650 = vadd.f32 %v1649, %v1561
  %v1651 = vrot.slane %v1650, 4
  %v1652 = vadd.f32 %v1650, %v1651
  %v1653 = vrot.slane %v1652, 2
  %v1654 = vadd.f32 %v1652, %v1653
  %v1655 = vrot.slane %v1654, 1
  %v1656 = vadd.f32 %v1654, %v1655
  %v1657 = vmul.f32 %v1656, %v481
  %v1658 = vsub.f32 %v1558, %v1657
  %v1659 = vsub.f32 %v1559, %v1657
  %v1660 = vsub.f32 %v1560, %v1657
  %v1661 = vsub.f32 %v1561, %v1657
  %v1662 = vmul.f32 %v1658, %v1658
  %v1663 = vmul.f32 %v1659, %v1659
  %v1664 = vmul.f32 %v1660, %v1660
  %v1665 = vmul.f32 %v1661, %v1661
  %v1666 = vadd.f32 %v1662, %v1663
  %v1667 = vadd.f32 %v1666, %v1664
  %v1668 = vadd.f32 %v1667, %v1665
  %v1669 = vrot.slane %v1668, 4
  %v1670 = vadd.f32 %v1668, %v1669
  %v1671 = vrot.slane %v1670, 2
  %v1672 = vadd.f32 %v1670, %v1671
  %v1673 = vrot.slane %v1672, 1
  %v1674 = vadd.f32 %v1672, %v1673
  %v1675 = vmul.f32 %v1674, %v481
  %v1676 = vadd.f32 %v1675, 1e-05
  %v1677 = vrsqrt.pop %v1676
  %v1678 = vmul.f32 %v1658, %v1677
  %v1679 = vmul.f32 %v1659, %v1677
  %v1680 = vmul.f32 %v1660, %v1677
  %v1681 = vmul.f32 %v1661, %v1677
  %v1682 = vadd.f32 %v1562, %v1563
  %v1683 = vadd.f32 %v1682, %v1564
  %v1684 = vadd.f32 %v1683, %v1565
  %v1685 = vrot.slane %v1684, 4
  %v1686 = vadd.f32 %v1684, %v1685
  %v1687 = vrot.slane %v1686, 2
  %v1688 = vadd.f32 %v1686, %v1687
  %v1689 = vrot.slane %v1688, 1
  %v1690 = vadd.f32 %v1688, %v1689
  %v1691 = vmul.f32 %v1690, %v481
  %v1692 = vsub.f32 %v1562, %v1691
  %v1693 = vsub.f32 %v1563, %v1691
  %v1694 = vsub.f32 %v1564, %v1691
  %v1695 = vsub.f32 %v1565, %v1691
  %v1696 = vmul.f32 %v1692, %v1692
  %v1697 = vmul.f32 %v1693, %v1693
  %v1698 = vmul.f32 %v1694, %v1694
  %v1699 = vmul.f32 %v1695, %v1695
  %v1700 = vadd.f32 %v1696, %v1697
  %v1701 = vadd.f32 %v1700, %v1698
  %v1702 = vadd.f32 %v1701, %v1699
  %v1703 = vrot.slane %v1702, 4
  %v1704 = vadd.f32 %v1702, %v1703
  %v1705 = vrot.slane %v1704, 2
  %v1706 = vadd.f32 %v1704, %v1705
  %v1707 = vrot.slane %v1706, 1
  %v1708 = vadd.f32 %v1706, %v1707
  %v1709 = vmul.f32 %v1708, %v481
  %v1710 = vadd.f32 %v1709, 1e-05
  %v1711 = vrsqrt.pop %v1710
  %v1712 = vmul.f32 %v1692, %v1711
  %v1713 = vmul.f32 %v1693, %v1711
  %v1714 = vmul.f32 %v1694, %v1711
  %v1715 = vmul.f32 %v1695, %v1711
  %v1716 = vadd.f32 %v1566, %v1567
  %v1717 = vadd.f32 %v1716, %v1568
  %v1718 = vadd.f32 %v1717, %v1569
  %v1719 = vrot.slane %v1718, 4
  %v1720 = vadd.f32 %v1718, %v1719
  %v1721 = vrot.slane %v1720, 2
  %v1722 = vadd.f32 %v1720, %v1721
  %v1723 = vrot.slane %v1722, 1
  %v1724 = vadd.f32 %v1722, %v1723
  %v1725 = vmul.f32 %v1724, %v481
  %v1726 = vsub.f32 %v1566, %v1725
  %v1727 = vsub.f32 %v1567, %v1725
  %v1728 = vsub.f32 %v1568, %v1725
  %v1729 = vsub.f32 %v1569, %v1725
  %v1730 = vmul.f32 %v1726, %v1726
  %v1731 = vmul.f32 %v1727, %v1727
  %v1732 = vmul.f32 %v1728, %v1728
  %v1733 = vmul.f32 %v1729, %v1729
  %v1734 = vadd.f32 %v1730, %v1731
  %v1735 = vadd.f32 %v1734, %v1732
  %v1736 = vadd.f32 %v1735, %v1733
  %v1737 = vrot.slane %v1736, 4
  %v1738 = vadd.f32 %v1736, %v1737
  %v1739 = vrot.slane %v1738, 2
  %v1740 = vadd.f32 %v1738, %v1739
  %v1741 = vrot.slane %v1740, 1
  %v1742 = vadd.f32 %v1740, %v1741
  %v1743 = vmul.f32 %v1742, %v481
  %v1744 = vadd.f32 %v1743, 1e-05
  %v1745 = vrsqrt.pop %v1744
  %v1746 = vmul.f32 %v1726, %v1745
  %v1747 = vmul.f32 %v1727, %v1745
  %v1748 = vmul.f32 %v1728, %v1745
  %v1749 = vmul.f32 %v1729, %v1745
  %v1750 = vadd.f32 %v1570, %v1571
  %v1751 = vadd.f32 %v1750, %v1572
  %v1752 = vadd.f32 %v1751, %v1573
  %v1753 = vrot.slane %v1752, 4
  %v1754 = vadd.f32 %v1752, %v1753
  %v1755 = vrot.slane %v1754, 2
  %v1756 = vadd.f32 %v1754, %v1755
  %v1757 = vrot.slane %v1756, 1
  %v1758 = vadd.f32 %v1756, %v1757
  %v1759 = vmul.f32 %v1758, %v481
  %v1760 = vsub.f32 %v1570, %v1759
  %v1761 = vsub.f32 %v1571, %v1759
  %v1762 = vsub.f32 %v1572, %v1759
  %v1763 = vsub.f32 %v1573, %v1759
  %v1764 = vmul.f32 %v1760, %v1760
  %v1765 = vmul.f32 %v1761, %v1761
  %v1766 = vmul.f32 %v1762, %v1762
  %v1767 = vmul.f32 %v1763, %v1763
  %v1768 = vadd.f32 %v1764, %v1765
  %v1769 = vadd.f32 %v1768, %v1766
  %v1770 = vadd.f32 %v1769, %v1767
  %v1771 = vrot.slane %v1770, 4
  %v1772 = vadd.f32 %v1770, %v1771
  %v1773 = vrot.slane %v1772, 2
  %v1774 = vadd.f32 %v1772, %v1773
  %v1775 = vrot.slane %v1774, 1
  %v1776 = vadd.f32 %v1774, %v1775
  %v1777 = vmul.f32 %v1776, %v481
  %v1778 = vadd.f32 %v1777, 1e-05
  %v1779 = vrsqrt.pop %v1778
  %v1780 = vmul.f32 %v1760, %v1779
  %v1781 = vmul.f32 %v1761, %v1779
  %v1782 = vmul.f32 %v1762, %v1779
  %v1783 = vmul.f32 %v1763, %v1779
  %1785 = vset.pattern.permute.xlu0 0
  %1786 = vperm.xlu0 %1785, %v1574
  %v1787 = vpop.permute.xlu0 %1786
  %1790 = vset.pattern.permute.xlu0 0
  %1791 = vperm.xlu0 %1790, %v1575
  %v1792 = vpop.permute.xlu0 %1791
  %1795 = vset.pattern.permute.xlu0 0
  %1796 = vperm.xlu0 %1795, %v1576
  %v1797 = vpop.permute.xlu0 %1796
  %1800 = vset.pattern.permute.xlu0 0
  %1801 = vperm.xlu0 %1800, %v1577
  %v1802 = vpop.permute.xlu0 %1801
  %1805 = vset.pattern.permute.xlu0 0
  %1806 = vperm.xlu0 %1805, %v1578
  %v1807 = vpop.permute.xlu0 %1806
  %1810 = vset.pattern.permute.xlu0 0
  %1811 = vperm.xlu0 %1810, %v1579
  %v1812 = vpop.permute.xlu0 %1811
  %1815 = vset.pattern.permute.xlu0 0
  %1816 = vperm.xlu0 %1815, %v1580
  %v1817 = vpop.permute.xlu0 %1816
  %1820 = vset.pattern.permute.xlu0 0
  %1821 = vperm.xlu0 %1820, %v1581
  %v1822 = vpop.permute.xlu0 %1821
  %1825 = vset.pattern.permute.xlu0 0
  %1826 = vperm.xlu0 %1825, %v1582
  %v1827 = vpop.permute.xlu0 %1826
  %1830 = vset.pattern.permute.xlu0 0
  %1831 = vperm.xlu0 %1830, %v1583
  %v1832 = vpop.permute.xlu0 %1831
  %1835 = vset.pattern.permute.xlu0 0
  %1836 = vperm.xlu0 %1835, %v1584
  %v1837 = vpop.permute.xlu0 %1836
  %1840 = vset.pattern.permute.xlu0 0
  %1841 = vperm.xlu0 %1840, %v1585
  %v1842 = vpop.permute.xlu0 %1841
  %1845 = vset.pattern.permute.xlu0 0
  %1846 = vperm.xlu0 %1845, %v1586
  %v1847 = vpop.permute.xlu0 %1846
  %1850 = vset.pattern.permute.xlu0 0
  %1851 = vperm.xlu0 %1850, %v1587
  %v1852 = vpop.permute.xlu0 %1851
  %1855 = vset.pattern.permute.xlu0 0
  %1856 = vperm.xlu0 %1855, %v1588
  %v1857 = vpop.permute.xlu0 %1856
  %1860 = vset.pattern.permute.xlu0 0
  %1861 = vperm.xlu0 %1860, %v1589
  %v1862 = vpop.permute.xlu0 %1861
  %1865 = vset.pattern.permute.xlu0 0
  %1866 = vperm.xlu0 %1865, %v1590
  %v1867 = vpop.permute.xlu0 %1866
  %1870 = vset.pattern.permute.xlu0 0
  %1871 = vperm.xlu0 %1870, %v1591
  %v1872 = vpop.permute.xlu0 %1871
  %1875 = vset.pattern.permute.xlu0 0
  %1876 = vperm.xlu0 %1875, %v1592
  %v1877 = vpop.permute.xlu0 %1876
  %1880 = vset.pattern.permute.xlu0 0
  %1881 = vperm.xlu0 %1880, %v1593
  %v1882 = vpop.permute.xlu0 %1881
  %v1884 = vmul.f32 %v1644, %v1787
  %v1885 = vmul.f32 %v1645, %v1792
  %v1886 = vmul.f32 %v1646, %v1797
  %v1887 = vmul.f32 %v1647, %v1802
  %v1888 = vmul.f32 %v1678, %v1807
  %v1889 = vmul.f32 %v1679, %v1812
  %v1890 = vmul.f32 %v1680, %v1817
  %v1891 = vmul.f32 %v1681, %v1822
  %v1892 = vmul.f32 %v1712, %v1827
  %v1893 = vmul.f32 %v1713, %v1832
  %v1894 = vmul.f32 %v1714, %v1837
  %v1895 = vmul.f32 %v1715, %v1842
  %v1896 = vmul.f32 %v1746, %v1847
  %v1897 = vmul.f32 %v1747, %v1852
  %v1898 = vmul.f32 %v1748, %v1857
  %v1899 = vmul.f32 %v1749, %v1862
  %v1900 = vmul.f32 %v1780, %v1867
  %v1901 = vmul.f32 %v1781, %v1872
  %v1902 = vmul.f32 %v1782, %v1877
  %v1903 = vmul.f32 %v1783, %v1882
  %1905 = vset.pattern.permute.xlu0 0
  %1906 = vperm.xlu0 %1905, %v1594
  %v1907 = vpop.permute.xlu0 %1906
  %1910 = vset.pattern.permute.xlu0 0
  %1911 = vperm.xlu0 %1910, %v1595
  %v1912 = vpop.permute.xlu0 %1911
  %1915 = vset.pattern.permute.xlu0 0
  %1916 = vperm.xlu0 %1915, %v1596
  %v1917 = vpop.permute.xlu0 %1916
  %1920 = vset.pattern.permute.xlu0 0
  %1921 = vperm.xlu0 %1920, %v1597
  %v1922 = vpop.permute.xlu0 %1921
  %1925 = vset.pattern.permute.xlu0 0
  %1926 = vperm.xlu0 %1925, %v1598
  %v1927 = vpop.permute.xlu0 %1926
  %1930 = vset.pattern.permute.xlu0 0
  %1931 = vperm.xlu0 %1930, %v1599
  %v1932 = vpop.permute.xlu0 %1931
  %1935 = vset.pattern.permute.xlu0 0
  %1936 = vperm.xlu0 %1935, %v1600
  %v1937 = vpop.permute.xlu0 %1936
  %1940 = vset.pattern.permute.xlu0 0
  %1941 = vperm.xlu0 %1940, %v1601
  %v1942 = vpop.permute.xlu0 %1941
  %1945 = vset.pattern.permute.xlu0 0
  %1946 = vperm.xlu0 %1945, %v1602
  %v1947 = vpop.permute.xlu0 %1946
  %1950 = vset.pattern.permute.xlu0 0
  %1951 = vperm.xlu0 %1950, %v1603
  %v1952 = vpop.permute.xlu0 %1951
  %1955 = vset.pattern.permute.xlu0 0
  %1956 = vperm.xlu0 %1955, %v1604
  %v1957 = vpop.permute.xlu0 %1956
  %1960 = vset.pattern.permute.xlu0 0
  %1961 = vperm.xlu0 %1960, %v1605
  %v1962 = vpop.permute.xlu0 %1961
  %1965 = vset.pattern.permute.xlu0 0
  %1966 = vperm.xlu0 %1965, %v1606
  %v1967 = vpop.permute.xlu0 %1966
  %1970 = vset.pattern.permute.xlu0 0
  %1971 = vperm.xlu0 %1970, %v1607
  %v1972 = vpop.permute.xlu0 %1971
  %1975 = vset.pattern.permute.xlu0 0
  %1976 = vperm.xlu0 %1975, %v1608
  %v1977 = vpop.permute.xlu0 %1976
  %1980 = vset.pattern.permute.xlu0 0
  %1981 = vperm.xlu0 %1980, %v1609
  %v1982 = vpop.permute.xlu0 %1981
  %1985 = vset.pattern.permute.xlu0 0
  %1986 = vperm.xlu0 %1985, %v1610
  %v1987 = vpop.permute.xlu0 %1986
  %1990 = vset.pattern.permute.xlu0 0
  %1991 = vperm.xlu0 %1990, %v1611
  %v1992 = vpop.permute.xlu0 %1991
  %1995 = vset.pattern.permute.xlu0 0
  %1996 = vperm.xlu0 %1995, %v1612
  %v1997 = vpop.permute.xlu0 %1996
  %2000 = vset.pattern.permute.xlu0 0
  %2001 = vperm.xlu0 %2000, %v1613
  %v2002 = vpop.permute.xlu0 %2001
  %v2004 = vadd.f32 %v1884, %v1907
  %v2005 = vadd.f32 %v1885, %v1912
  %v2006 = vadd.f32 %v1886, %v1917
  %v2007 = vadd.f32 %v1887, %v1922
  %v2008 = vadd.f32 %v1888, %v1927
  %v2009 = vadd.f32 %v1889, %v1932
  %v2010 = vadd.f32 %v1890, %v1937
  %v2011 = vadd.f32 %v1891, %v1942
  %v2012 = vadd.f32 %v1892, %v1947
  %v2013 = vadd.f32 %v1893, %v1952
  %v2014 = vadd.f32 %v1894, %v1957
  %v2015 = vadd.f32 %v1895, %v1962
  %v2016 = vadd.f32 %v1896, %v1967
  %v2017 = vadd.f32 %v1897, %v1972
  %v2018 = vadd.f32 %v1898, %v1977
  %v2019 = vadd.f32 %v1899, %v1982
  %v2020 = vadd.f32 %v1900, %v1987
  %v2021 = vadd.f32 %v1901, %v1992
  %v2022 = vadd.f32 %v1902, %v1997
  %v2023 = vadd.f32 %v1903, %v2002
  %v2024 = vld [vmem:[%s8] sm:$0xff]
  %v2025 = vld [vmem:[%s8 + $0x8] sm:$0xff]
  %v2026 = vld [vmem:[%s8 + $0x10] sm:$0xff]
  %v2027 = vld [vmem:[%s8 + $0x18] sm:$0xff]
  %v2028 = vld [vmem:[%s8 + $0x20] sm:$0xff]
  %v2029 = vld [vmem:[%s8 + $0x28] sm:$0xff]
  %v2030 = vld [vmem:[%s8 + $0x30] sm:$0xff]
  %v2031 = vld [vmem:[%s8 + $0x38] sm:$0xff]
  %v2032 = vld [vmem:[%s8 + $0x40] sm:$0xff]
  %v2033 = vld [vmem:[%s8 + $0x48] sm:$0xff]
  %v2034 = vld [vmem:[%s8 + $0x50] sm:$0xff]
  %v2035 = vld [vmem:[%s8 + $0x58] sm:$0xff]
  %v2036 = vld [vmem:[%s8 + $0x60] sm:$0xff]
  %v2037 = vld [vmem:[%s8 + $0x68] sm:$0xff]
  %v2038 = vld [vmem:[%s8 + $0x70] sm:$0xff]
  %v2039 = vld [vmem:[%s8 + $0x78] sm:$0xff]
  %v2040 = vld [vmem:[%s8 + $0x80] sm:$0xff]
  %v2041 = vld [vmem:[%s8 + $0x88] sm:$0xff]
  %v2042 = vld [vmem:[%s8 + $0x90] sm:$0xff]
  %v2043 = vld [vmem:[%s8 + $0x98] sm:$0xff]
  %v2044 = vld [vmem:[%s8 + $0xa0] sm:$0xff]
  %v2045 = vld [vmem:[%s8 + $0xa8] sm:$0xff]
  %v2046 = vld [vmem:[%s9] sm:$0xff]
  %v2047 = vld [vmem:[%s9 + $0x8] sm:$0xff]
  %v2048 = vld [vmem:[%s9 + $0x10] sm:$0xff]
  %v2049 = vld [vmem:[%s9 + $0x18] sm:$0xff]
  %v2050 = vld [vmem:[%s9 + $0x20] sm:$0xff]
  %v2051 = vld [vmem:[%s9 + $0x28] sm:$0xff]
  %v2052 = vld [vmem:[%s9 + $0x30] sm:$0xff]
  %v2053 = vld [vmem:[%s9 + $0x38] sm:$0xff]
  %v2054 = vld [vmem:[%s9 + $0x40] sm:$0xff]
  %v2055 = vld [vmem:[%s9 + $0x48] sm:$0xff]
  %v2056 = vld [vmem:[%s9 + $0x50] sm:$0xff]
  %2058 = vset.pattern.permute.xlu0 0
  %2059 = vperm.xlu0 %2058, %v2046
  %v2060 = vpop.permute.xlu0 %2059
  %2063 = vset.pattern.permute.xlu0 0
  %2064 = vperm.xlu0 %2063, %v2047
  %v2065 = vpop.permute.xlu0 %2064
  %2068 = vset.pattern.permute.xlu0 0
  %2069 = vperm.xlu0 %2068, %v2048
  %v2070 = vpop.permute.xlu0 %2069
  %2073 = vset.pattern.permute.xlu0 0
  %2074 = vperm.xlu0 %2073, %v2049
  %v2075 = vpop.permute.xlu0 %2074
  %2078 = vset.pattern.permute.xlu0 0
  %2079 = vperm.xlu0 %2078, %v2050
  %v2080 = vpop.permute.xlu0 %2079
  %2083 = vset.pattern.permute.xlu0 0
  %2084 = vperm.xlu0 %2083, %v2051
  %v2085 = vpop.permute.xlu0 %2084
  %2088 = vset.pattern.permute.xlu0 0
  %2089 = vperm.xlu0 %2088, %v2052
  %v2090 = vpop.permute.xlu0 %2089
  %2093 = vset.pattern.permute.xlu0 0
  %2094 = vperm.xlu0 %2093, %v2053
  %v2095 = vpop.permute.xlu0 %2094
  %2098 = vset.pattern.permute.xlu0 0
  %2099 = vperm.xlu0 %2098, %v2054
  %v2100 = vpop.permute.xlu0 %2099
  %2103 = vset.pattern.permute.xlu0 0
  %2104 = vperm.xlu0 %2103, %v2055
  %v2105 = vpop.permute.xlu0 %2104
  %2108 = vset.pattern.permute.xlu0 0
  %2109 = vperm.xlu0 %2108, %v2056
  %v2110 = vpop.permute.xlu0 %2109
  %v2113 = vsel %vm923, %v2025, 0
  %v2116 = vsel %vm923, %v2027, 0
  %v2119 = vsel %vm923, %v2029, 0
  %v2122 = vsel %vm923, %v2031, 0
  %v2125 = vsel %vm923, %v2033, 0
  %v2128 = vsel %vm923, %v2035, 0
  %v2131 = vsel %vm923, %v2037, 0
  %v2134 = vsel %vm923, %v2039, 0
  %v2137 = vsel %vm923, %v2041, 0
  %v2140 = vsel %vm923, %v2043, 0
  %v2143 = vsel %vm923, %v2045, 0
  %2145 = vmatprep.subr.mxu0 0.0
  %2146 = vmatpush1.msra.mxu0 %v2004
  %2147 = vmatprep.subr.mxu0 0.0
  %2148 = vmatpush1.msra.mxu0 %v2005
  %2149 = vmatprep.subr.mxu0 0.0
  %2150 = vmatpush1.msra.mxu0 %v2006
  %2151 = vmatprep.subr.mxu0 0.0
  %2152 = vmatpush1.msra.mxu0 %v2007
  %2153 = vmatprep.subr.mxu0 0.0
  %2154 = vmatpush1.msra.mxu0 %v2008
  %2155 = vmatprep.subr.mxu0 0.0
  %2156 = vmatpush1.msra.mxu0 %v2009
  %2157 = vmatprep.subr.mxu0 0.0
  %2158 = vmatpush1.msra.mxu0 %v2010
  %2159 = vmatprep.subr.mxu0 0.0
  %2160 = vmatpush1.msra.mxu0 %v2011
  %2161 = vmatprep.subr.mxu0 0.0
  %2162 = vmatpush1.msra.mxu0 %v2012
  %2163 = vmatprep.subr.mxu0 0.0
  %2164 = vmatpush1.msra.mxu0 %v2013
  %2165 = vmatprep.subr.mxu0 0.0
  %2166 = vmatpush1.msra.mxu0 %v2014
  %2167 = vmatprep.subr.mxu0 0.0
  %2168 = vmatpush1.msra.mxu0 %v2015
  %2169 = vmatprep.subr.mxu0 0.0
  %2170 = vmatpush1.msra.mxu0 %v2016
  %2171 = vmatprep.subr.mxu0 0.0
  %2172 = vmatpush1.msra.mxu0 %v2017
  %2173 = vmatprep.subr.mxu0 0.0
  %2174 = vmatpush1.msra.mxu0 %v2018
  %2175 = vmatprep.subr.mxu0 0.0
  %2176 = vmatpush1.msra.mxu0 %v2019
  %2177 = vmatprep.subr.mxu0 0.0
  %2178 = vmatpush1.msra.mxu0 %v2020
  %2179 = vmatprep.subr.mxu0 0.0
  %2180 = vmatpush1.msra.mxu0 %v2021
  %2181 = vmatprep.subr.mxu0 0.0
  %2182 = vmatpush1.msra.mxu0 %v2022
  %2183 = vmatprep.subr.mxu0 0.0
  %2184 = vmatpush1.msra.mxu0 %v2023
  %2185 = vmatprep.subr.mxu0 0.0
  %2186 = vmatpush1.msra.mxu0 0.0
  %2187 = vmatprep.subr.mxu0 0.0
  %2188 = vmatpush1.msra.mxu0 0.0
  %2189 = vmatprep.subr.mxu0 0.0
  %2190 = vmatpush1.msra.mxu0 0.0
  %2191 = vmatprep.subr.mxu0 0.0
  %2192 = vmatpush1.msra.mxu0 0.0
  %2193 = vmatprep.subr.mxu0 0.0
  %2194 = vmatpush1.msra.mxu0 0.0
  %2195 = vmatprep.subr.mxu0 0.0
  %2196 = vmatpush1.msra.mxu0 0.0
  %2197 = vmatprep.subr.mxu0 0.0
  %2198 = vmatpush1.msra.mxu0 0.0
  %2199 = vmatprep.subr.mxu0 0.0
  %2200 = vmatpush1.msra.mxu0 0.0
  %2201 = vmatprep.subr.mxu0 0.0
  %2202 = vmatpush1.msra.mxu0 0.0
  %2203 = vmatprep.subr.mxu0 0.0
  %2204 = vmatpush1.msra.mxu0 0.0
  %2205 = vmatprep.subr.mxu0 0.0
  %2206 = vmatpush1.msra.mxu0 0.0
  %2207 = vmatprep.subr.mxu0 0.0
  %2208 = vmatpush1.msra.mxu0 0.0
  %2209 = vmatprep.mubr.f32.mxu0 %v2113
  %2210 = vmatmul.mubr.f32.gmra.mrb[0].mxu0 %v2024
  %v2211 = vpop.f32.mrb[0].mxu0
  %v2212 = vadd.f32 %v2060, %v2211
  %v2213 = vpop.f32.mrb[0].mxu0
  %2214 = vmatprep.mubr.f32.mxu0 %v2116
  %2215 = vmatmul.mubr.f32.gmra.mrb[0].mxu0 %v2026
  %v2216 = vpop.f32.mrb[0].mxu0
  %v2217 = vadd.f32 %v2065, %v2216
  %v2218 = vpop.f32.mrb[0].mxu0
  %2219 = vmatprep.mubr.f32.mxu0 %v2119
  %2220 = vmatmul.mubr.f32.gmra.mrb[0].mxu0 %v2028
  %v2221 = vpop.f32.mrb[0].mxu0
  %v2222 = vadd.f32 %v2070, %v2221
  %v2223 = vpop.f32.mrb[0].mxu0
  %2224 = vmatprep.mubr.f32.mxu0 %v2122
  %2225 = vmatmul.mubr.f32.gmra.mrb[0].mxu0 %v2030
  %v2226 = vpop.f32.mrb[0].mxu0
  %v2227 = vadd.f32 %v2075, %v2226
  %v2228 = vpop.f32.mrb[0].mxu0
  %2229 = vmatprep.mubr.f32.mxu0 %v2125
  %2230 = vmatmul.mubr.f32.gmra.mrb[0].mxu0 %v2032
  %v2231 = vpop.f32.mrb[0].mxu0
  %v2232 = vadd.f32 %v2080, %v2231
  %v2233 = vpop.f32.mrb[0].mxu0
  %2234 = vmatprep.mubr.f32.mxu0 %v2128
  %2235 = vmatmul.mubr.f32.gmra.mrb[0].mxu0 %v2034
  %v2236 = vpop.f32.mrb[0].mxu0
  %v2237 = vadd.f32 %v2085, %v2236
  %v2238 = vpop.f32.mrb[0].mxu0
  %2239 = vmatprep.mubr.f32.mxu0 %v2131
  %2240 = vmatmul.mubr.f32.gmra.mrb[0].mxu0 %v2036
  %v2241 = vpop.f32.mrb[0].mxu0
  %v2242 = vadd.f32 %v2090, %v2241
  %v2243 = vpop.f32.mrb[0].mxu0
  %2244 = vmatprep.mubr.f32.mxu0 %v2134
  %2245 = vmatmul.mubr.f32.gmra.mrb[0].mxu0 %v2038
  %v2246 = vpop.f32.mrb[0].mxu0
  %v2247 = vadd.f32 %v2095, %v2246
  %v2248 = vpop.f32.mrb[0].mxu0
  %2249 = vmatprep.mubr.f32.mxu0 %v2137
  %2250 = vmatmul.mubr.f32.gmra.mrb[0].mxu0 %v2040
  %v2251 = vpop.f32.mrb[0].mxu0
  %v2252 = vadd.f32 %v2100, %v2251
  %v2253 = vpop.f32.mrb[0].mxu0
  %2254 = vmatprep.mubr.f32.mxu0 %v2140
  %2255 = vmatmul.mubr.f32.gmra.mrb[0].mxu0 %v2042
  %v2256 = vpop.f32.mrb[0].mxu0
  %v2257 = vadd.f32 %v2105, %v2256
  %v2258 = vpop.f32.mrb[0].mxu0
  %2259 = vmatprep.mubr.f32.mxu0 %v2143
  %2260 = vmatmul.mubr.f32.gmra.mrb[0].mxu0 %v2044
  %v2261 = vpop.f32.mrb[0].mxu0
  %v2262 = vadd.f32 %v2110, %v2261
  %v2263 = vpop.f32.mrb[0].mxu0
  %2264 = vdwg.mxu0
  %vm2265 = vcmask 1041408
  %v2266 = vsel %vm2265, %v2262, -inf
  %v2267 = vrot.slane %v2266, 4
  %v2268 = vmax.f32 %v2266, %v2267
  %v2269 = vrot.slane %v2268, 2
  %v2270 = vmax.f32 %v2268, %v2269
  %v2271 = vrot.slane %v2270, 1
  %v2272 = vmax.f32 %v2270, %v2271
  %v2273 = vsub.f32 %v2262, %v2272
  %v2274 = vmul.f32 %v2273, 1.442695
  %v2275 = vpow.pop %v2274
  %v2276 = vsel %vm2265, %v2275, 0.0
  %v2277 = vrot.slane %v2276, 4
  %v2278 = vadd.f32 %v2276, %v2277
  %v2279 = vrot.slane %v2278, 2
  %v2280 = vadd.f32 %v2278, %v2279
  %v2281 = vrot.slane %v2280, 1
  %v2282 = vadd.f32 %v2280, %v2281
  %v2283 = vrcp.pop %v2282
  %v2284 = vlaneseq
  %v2285 = vshrl.u32 %v2284, 7
  %v2286 = vsub.s32 0, %v2285
  %v2287 = vrot.slane %v2275, %v2286
  %v2288 = vmul.f32 %v2212, %v2287
  %v2289 = vmul.f32 %v2217, %v2287
  %v2290 = vlaneseq
  %v2291 = vshrl.u32 %v2290, 7
  %v2292 = vsub.s32 1, %v2291
  %v2293 = vrot.slane %v2275, %v2292
  %v2294 = vmul.f32 %v2222, %v2293
  %v2295 = vmul.f32 %v2227, %v2293
  %v2296 = vadd.f32 %v2288, %v2294
  %v2297 = vadd.f32 %v2289, %v2295
  %v2298 = vmul.f32 %v2296, %v2283
  %v2299 = vmul.f32 %v2297, %v2283
  %vm2300 = vcmask 1044482
  %v2301 = vsel %vm2300, %v2262, -inf
  %v2302 = vrot.slane %v2301, 4
  %v2303 = vmax.f32 %v2301, %v2302
  %v2304 = vrot.slane %v2303, 2
  %v2305 = vmax.f32 %v2303, %v2304
  %v2306 = vrot.slane %v2305, 1
  %v2307 = vmax.f32 %v2305, %v2306
  %v2308 = vsub.f32 %v2262, %v2307
  %v2309 = vmul.f32 %v2308, 1.442695
  %v2310 = vpow.pop %v2309
  %v2312 = vrot.slane %v2310, 2
  %vm2314 = vcmask 1042432
  %v2315 = vsel %vm2314, %v2312, 0.0
  %v2316 = vrot.slane %v2315, 4
  %v2317 = vadd.f32 %v2315, %v2316
  %v2318 = vrot.slane %v2317, 2
  %v2319 = vadd.f32 %v2317, %v2318
  %v2320 = vrot.slane %v2319, 1
  %v2321 = vadd.f32 %v2319, %v2320
  %v2322 = vrcp.pop %v2321
  %v2323 = vlaneseq
  %v2324 = vshrl.u32 %v2323, 7
  %v2325 = vsub.s32 2, %v2324
  %v2326 = vrot.slane %v2310, %v2325
  %v2327 = vmul.f32 %v2232, %v2326
  %v2328 = vmul.f32 %v2237, %v2326
  %v2329 = vlaneseq
  %v2330 = vshrl.u32 %v2329, 7
  %v2331 = vsub.s32 3, %v2330
  %v2332 = vrot.slane %v2310, %v2331
  %v2333 = vmul.f32 %v2242, %v2332
  %v2334 = vmul.f32 %v2247, %v2332
  %v2335 = vadd.f32 %v2327, %v2333
  %v2336 = vadd.f32 %v2328, %v2334
  %v2337 = vlaneseq
  %v2338 = vshrl.u32 %v2337, 7
  %v2339 = vsub.s32 4, %v2338
  %v2340 = vrot.slane %v2310, %v2339
  %v2341 = vmul.f32 %v2252, %v2340
  %v2342 = vmul.f32 %v2257, %v2340
  %v2343 = vadd.f32 %v2335, %v2341
  %v2344 = vadd.f32 %v2336, %v2342
  %v2345 = vmul.f32 %v2343, %v2322
  %v2346 = vmul.f32 %v2344, %v2322
  %v2347 = vmul.f32 %v2298, %v2345
  %v2348 = vmul.f32 %v2299, %v2346
  %v2349 = vadd.f32 %v2347, %v2348
  %v2350 = vrot.slane %v2349, 4
  %v2351 = vadd.f32 %v2349, %v2350
  %v2352 = vrot.slane %v2351, 2
  %v2353 = vadd.f32 %v2351, %v2352
  %v2354 = vrot.slane %v2353, 1
  %v2355 = vadd.f32 %v2353, %v2354
  %2356 = vst [vmem:[%s10] sm:$0x1] %v2355
  // Predicated region
  $region42: #{forward.1} parent=0 // pred_check
    _
  $region43: #{forward.1} parent=0 // pred_check_branch
    %2358 = sbr.rel (0) target = $region45
  $region44: #{forward.1} parent=0 // pred_region
    _
  $region45: #{forward.1} parent=0 // pred_fallthru
    _
  // Predicated region
  $region46: #{forward.1} parent=0 // pred_check
    _
  $region47: #{forward.1} parent=0 // pred_check_branch
    %2360 = sbr.rel (0) target = $region49
  $region48: #{forward.1} parent=0 // pred_region
    _
  $region49: #{forward.1} parent=0 // pred_fallthru
    _

</llo_original>
